<compile_context>
chip_gen: v5e
topology: v5e:2x2
jax: 0.10.0
libtpu: 0.0.40
codegen_flags: <defaults>
</compile_context>

<pallas_src>
import functools

import jax
import jax.numpy as jnp
from jax import lax
from jax.experimental import pallas as pl
from jax.experimental.pallas import tpu as pltpu

HIDDEN_SIZE = 32
INPUT_SIZE = 1
NUM_LAYERS = 2
OUTPUT_SIZE = 1
LANES = 128


def _lstm_kernel(x_ref,      # (T, Bp, 1)  f32 raw input, time-major
                 wih0_ref,   # (1, 4H)     f32 layer-0 input weight (D=1 row)
                 b0_ref,     # (1, 4H)     f32 bias_ih_l0 + bias_hh_l0
                 whhbd_ref,  # (2H, 8H)    bf16 blockdiag(Whh_l0, Whh_l1)
                 wih1_ref,   # (H, 4H)     bf16 layer-1 input weight
                 b1_ref,     # (1, 4H)     f32 bias_ih_l1 + bias_hh_l1
                 wfc_ref,    # (H, 128)    bf16 fc weight, zero-padded lanes
                 bfc_ref,    # (1, 128)    f32 fc bias, zero-padded lanes
                 out_ref,    # (Bp, 128)   f32
                 *, seq_len, hidden_size):
    H = hidden_size
    Bp = x_ref.shape[1]

    wih0 = wih0_ref[...]
    whh_bd = whhbd_ref[...]
    wih1 = wih1_ref[...]
    # Hoisted bias broadcasts (JAX does not CSE broadcast_in_dim inside loops).
    b0 = jnp.broadcast_to(b0_ref[...], (Bp, 4 * H))
    b1 = jnp.broadcast_to(b1_ref[...], (Bp, 4 * H))

    # Single-tanh trick: sigmoid(x) = 0.5 + 0.5*tanh(0.5*x).  Scale the i/f/o
    # column blocks by 0.5, the g block by 1.0, take ONE full-width tanh, and
    # recover i/f/o with a cheap VPU affine.
    lane = lax.broadcasted_iota(jnp.int32, (1, 4 * H), 1)
    is_g = (lane >= 2 * H) & (lane < 3 * H)
    scale = jnp.broadcast_to(
        jnp.where(is_g, 1.0, 0.5).astype(jnp.float32), (Bp, 4 * H))

    def gates_to_hc(gates, c):
        t = jnp.tanh(gates * scale)              # one 128-lane EUP pass
        i = 0.5 * t[:, 0 * H:1 * H] + 0.5
        f = 0.5 * t[:, 1 * H:2 * H] + 0.5
        g = t[:, 2 * H:3 * H]
        o = 0.5 * t[:, 3 * H:4 * H] + 0.5
        c_new = f * c + i * g
        h_new = o * jnp.tanh(c_new)
        return h_new, c_new

    def step(t, carry):
        h0, c0, h1, c1 = carry
        # Both layers' recurrent contributions in ONE block-diagonal MXU push
        # (depends only on the previous step's h0/h1).
        hh = jnp.concatenate([h0, h1], axis=-1).astype(jnp.bfloat16)    # (Bp,2H)
        rec = jnp.dot(hh, whh_bd, preferred_element_type=jnp.float32)   # (Bp,8H)
        # Layer-0 input projection: D=1 => broadcast-multiply on the VPU,
        # no MXU push, off the sequential dependence chain.
        xp = x_ref[t] * wih0 + b0                                       # (Bp,4H)
        gates0 = xp + rec[:, :4 * H]
        h0, c0 = gates_to_hc(gates0, c0)
        # Only dependent matmul left on the chain: K = H = 32.
        gates1 = (jnp.dot(h0.astype(jnp.bfloat16), wih1,
                          preferred_element_type=jnp.float32)
                  + rec[:, 4 * H:] + b1)
        h1, c1 = gates_to_hc(gates1, c1)
        return (h0, c0, h1, c1)

    zeros = jnp.zeros((Bp, H), jnp.float32)
    # TODO(synk): for T beyond ~32 switch to a bounded unroll (e.g. unroll=8)
    # to keep the 64-vreg budget; T=8 here so full unroll is cheapest.
    h0, c0, h1, c1 = lax.fori_loop(0, seq_len, step,
                                   (zeros, zeros, zeros, zeros),
                                   unroll=True)

    # fc(out[:, -1, :]) == fc(final h of top layer).  Lane-dense (Bp,128)
    # store; the real output is column 0, sliced in the wrapper.
    out_ref[...] = (jnp.dot(h1.astype(jnp.bfloat16), wfc_ref[...],
                            preferred_element_type=jnp.float32)
                    + bfc_ref[...]).astype(out_ref.dtype)


def lstm_model_forward(x, params):
    """x: (B, T, INPUT_SIZE) float32 (PyTorch batch_first layout)."""
    B, T, D = x.shape
    assert D == INPUT_SIZE == 1, "in-kernel input projection assumes D == 1"
    H = HIDDEN_SIZE
    O = OUTPUT_SIZE
    Bp = ((B + 7) // 8) * 8          # pad batch to full sublanes

    # --- wrapper-side weight prep (tiny, one-time) ---
    x_tm = jnp.transpose(x, (1, 0, 2)).astype(jnp.float32)       # (T, B, 1)
    if Bp != B:
        x_tm = jnp.pad(x_tm, ((0, 0), (0, Bp - B), (0, 0)))

    wih0 = params["weight_ih_l0"].T.astype(jnp.float32)          # (1, 4H)
    b0 = (params["bias_ih_l0"] + params["bias_hh_l0"]).reshape(1, 4 * H)
    b1 = (params["bias_ih_l1"] + params["bias_hh_l1"]).reshape(1, 4 * H)

    # Block-diagonal recurrent weight: [h0|h1] @ whh_bd -> [h0@Whh0 | h1@Whh1]
    whh_bd = jnp.zeros((2 * H, 8 * H), jnp.float32)
    whh_bd = whh_bd.at[:H, :4 * H].set(params["weight_hh_l0"].T)
    whh_bd = whh_bd.at[H:, 4 * H:].set(params["weight_hh_l1"].T)
    whh_bd = whh_bd.astype(jnp.bfloat16)

    wih1 = params["weight_ih_l1"].T.astype(jnp.bfloat16)         # (H, 4H)

    wfc = jnp.zeros((H, LANES), jnp.float32)
    wfc = wfc.at[:, :O].set(params["fc_weight"].T).astype(jnp.bfloat16)
    bfc = jnp.zeros((1, LANES), jnp.float32).at[:, :O].set(
        params["fc_bias"].reshape(1, O))

    kernel = functools.partial(_lstm_kernel, seq_len=T, hidden_size=H)
    vmem = pl.BlockSpec(memory_space=pltpu.MemorySpace.VMEM)

    # Gridless call: single invocation, whole operands resident in VMEM
    # (~a few KiB), no double-buffering / grid prologue.
    # TODO(synk): if batch grows large on v7x, add a 'parallel' batch grid
    # axis so the second TensorCore is used; also re-budget resident VMEM
    # against the 64 MiB v7x ceiling if T*B grows.
    out_padded = pl.pallas_call(
        kernel,
        out_shape=jax.ShapeDtypeStruct((Bp, LANES), jnp.float32),
        in_specs=[vmem] * 8,
        out_specs=vmem,
    )(x_tm, wih0, b0, whh_bd, wih1, b1, wfc, bfc)

    return out_padded[:B, :O]


def _lstm_reference(x, params):
    """Pure-JAX f32 reference mirroring the PyTorch module (for validation)."""
    H = HIDDEN_SIZE
    B = x.shape[0]

    def cell(x_t, h, c, wih, whh, b):
        gates = x_t @ wih.T + h @ whh.T + b
        i = jax.nn.sigmoid(gates[:, 0 * H:1 * H])
        f = jax.nn.sigmoid(gates[:, 1 * H:2 * H])
        g = jnp.tanh(gates[:, 2 * H:3 * H])
        o = jax.nn.sigmoid(gates[:, 3 * H:4 * H])
        c = f * c + i * g
        h = o * jnp.tanh(c)
        return h, c

    def step(carry, x_t):
        h0, c0, h1, c1 = carry
        h0, c0 = cell(x_t, h0, c0, params["weight_ih_l0"],
                      params["weight_hh_l0"],
                      params["bias_ih_l0"] + params["bias_hh_l0"])
        h1, c1 = cell(h0, h1, c1, params["weight_ih_l1"],
                      params["weight_hh_l1"],
                      params["bias_ih_l1"] + params["bias_hh_l1"])
        return (h0, c0, h1, c1), None

    zeros = jnp.zeros((B, H), jnp.float32)
    (h0, c0, h1, c1), _ = lax.scan(step, (zeros,) * 4,
                                   jnp.transpose(x, (1, 0, 2)))
    return h1 @ params["fc_weight"].T + params["fc_bias"]


def init_params(key):
    """Deterministic init mirroring nn.LSTM / nn.Linear shapes."""
    H, D, O = HIDDEN_SIZE, INPUT_SIZE, OUTPUT_SIZE
    bound = 1.0 / jnp.sqrt(jnp.float32(H))
    shapes = {
        "weight_ih_l0": (4 * H, D),
        "weight_hh_l0": (4 * H, H),
        "bias_ih_l0": (4 * H,),
        "bias_hh_l0": (4 * H,),
        "weight_ih_l1": (4 * H, H),
        "weight_hh_l1": (4 * H, H),
        "bias_ih_l1": (4 * H,),
        "bias_hh_l1": (4 * H,),
        "fc_weight": (O, H),
        "fc_bias": (O,),
    }
    params = {}
    for name, shape in sorted(shapes.items()):
        key, sub = jax.random.split(key)
        params[name] = jax.random.uniform(
            sub, shape, jnp.float32, minval=-bound, maxval=bound)
    return params


if __name__ == "__main__":
    key = jax.random.PRNGKey(0)
    pkey, xkey = jax.random.split(key)
    params = init_params(pkey)

    B, T = 2, 8
    x = jax.random.normal(xkey, (B, T, INPUT_SIZE), jnp.float32)

    out = lstm_model_forward(x, params)
    jax.block_until_ready(out)
    assert out.shape == (B, OUTPUT_SIZE) and out.dtype == jnp.float32

    # Kernel uses bf16 MXU operands -> small quantization error vs f32 ref.
    ref = _lstm_reference(x, params)
    assert jnp.allclose(out, ref, atol=3e-2, rtol=3e-2), (out, ref)

    print("KERNEL_OK")
</pallas_src>

<mosaic_0001>
module attributes {stable_mosaic.version = 11 : i64} {
  func.func @_lstm_kernel(%arg0: memref<8x8x1xf32, #tpu.memory_space<vmem>>, %arg1: memref<1x128xf32, #tpu.memory_space<vmem>>, %arg2: memref<1x128xf32, #tpu.memory_space<vmem>>, %arg3: memref<64x256xbf16, #tpu.memory_space<vmem>>, %arg4: memref<32x128xbf16, #tpu.memory_space<vmem>>, %arg5: memref<1x128xf32, #tpu.memory_space<vmem>>, %arg6: memref<32x128xbf16, #tpu.memory_space<vmem>>, %arg7: memref<1x128xf32, #tpu.memory_space<vmem>>, %arg8: memref<8x128xf32, #tpu.memory_space<vmem>>) attributes {dimension_semantics = [], scalar_prefetch = 0 : i64, scratch_operands = 0 : i64, tpu.core_type = #tpu.core_type<tc>} {
    %c0 = arith.constant 0 : index
    %c0_0 = arith.constant 0 : index
    %0 = vector.load %arg1[%c0, %c0_0] : memref<1x128xf32, #tpu.memory_space<vmem>>, vector<1x128xf32>
    %c0_1 = arith.constant 0 : index
    %c0_2 = arith.constant 0 : index
    %1 = vector.load %arg3[%c0_1, %c0_2] : memref<64x256xbf16, #tpu.memory_space<vmem>>, vector<64x256xbf16>
    %c0_3 = arith.constant 0 : index
    %c0_4 = arith.constant 0 : index
    %2 = vector.load %arg4[%c0_3, %c0_4] : memref<32x128xbf16, #tpu.memory_space<vmem>>, vector<32x128xbf16>
    %c0_5 = arith.constant 0 : index
    %c0_6 = arith.constant 0 : index
    %3 = vector.load %arg2[%c0_5, %c0_6] : memref<1x128xf32, #tpu.memory_space<vmem>>, vector<1x128xf32>
    %4 = vector.shape_cast %3 : vector<1x128xf32> to vector<1x128xf32>
    %5 = vector.broadcast %4 : vector<1x128xf32> to vector<8x128xf32>
    %c0_7 = arith.constant 0 : index
    %c0_8 = arith.constant 0 : index
    %6 = vector.load %arg5[%c0_7, %c0_8] : memref<1x128xf32, #tpu.memory_space<vmem>>, vector<1x128xf32>
    %7 = vector.shape_cast %6 : vector<1x128xf32> to vector<1x128xf32>
    %8 = vector.broadcast %7 : vector<1x128xf32> to vector<8x128xf32>
    %9 = tpu.iota {dimensions = array<i32: 1>} : vector<1x128xi32>
    %c64_i32 = arith.constant 64 : i32
    %10 = vector.broadcast %c64_i32 : i32 to vector<1x128xi32>
    %11 = arith.cmpi sge, %9, %10 : vector<1x128xi32>
    %c96_i32 = arith.constant 96 : i32
    %12 = vector.broadcast %c96_i32 : i32 to vector<1x128xi32>
    %13 = arith.cmpi slt, %9, %12 : vector<1x128xi32>
    %14 = arith.andi %11, %13 : vector<1x128xi1>
    %cst = arith.constant 1.000000e+00 : f32
    %cst_9 = arith.constant 5.000000e-01 : f32
    %15 = vector.broadcast %cst : f32 to vector<1x128xf32>
    %16 = vector.broadcast %cst_9 : f32 to vector<1x128xf32>
    %17 = arith.select %14, %15, %16 : vector<1x128xi1>, vector<1x128xf32>
    %18 = vector.shape_cast %17 : vector<1x128xf32> to vector<1x128xf32>
    %19 = vector.broadcast %18 : vector<1x128xf32> to vector<8x128xf32>
    %cst_10 = arith.constant 0.000000e+00 : f32
    %20 = vector.broadcast %cst_10 : f32 to vector<8x32xf32>
    %c0_i32 = arith.constant 0 : i32
    %21 = tpu.concatenate %20, %20 in 1 : vector<8x32xf32>, vector<8x32xf32> -> vector<8x64xf32>
    %22 = arith.truncf %21 : vector<8x64xf32> to vector<8x64xbf16>
    %cst_11 = arith.constant dense<0.000000e+00> : vector<8x256xf32>
    %23 = tpu.matmul %22, %1, %cst_11 {dimension_numbers = #tpu.dot_dimension_numbers<[1], [0], [0], [1], [0, 0, 1, 1], [], []>} : vector<8x64xbf16>, vector<64x256xbf16>, vector<8x256xf32> -> vector<8x256xf32>
    %24 = arith.index_cast %c0_i32 : i32 to index
    %c0_12 = arith.constant 0 : index
    %c0_13 = arith.constant 0 : index
    %25 = vector.load %arg0[%24, %c0_12, %c0_13] : memref<8x8x1xf32, #tpu.memory_space<vmem>>, vector<1x8x1xf32>
    %26 = vector.shape_cast %25 : vector<1x8x1xf32> to vector<8x1xf32>
    %27 = vector.broadcast %26 : vector<8x1xf32> to vector<8x128xf32>
    %28 = vector.broadcast %0 : vector<1x128xf32> to vector<8x128xf32>
    %29 = arith.mulf %27, %28 : vector<8x128xf32>
    %30 = arith.addf %29, %5 : vector<8x128xf32>
    %31 = vector.extract_strided_slice %23 {offsets = [0, 0], sizes = [8, 128], strides = [1, 1]} : vector<8x256xf32> to vector<8x128xf32>
    %32 = arith.addf %30, %31 : vector<8x128xf32>
    %33 = arith.mulf %32, %19 : vector<8x128xf32>
    %34 = math.tanh %33 : vector<8x128xf32>
    %35 = vector.extract_strided_slice %34 {offsets = [0, 0], sizes = [8, 32], strides = [1, 1]} : vector<8x128xf32> to vector<8x32xf32>
    %cst_14 = arith.constant 5.000000e-01 : f32
    %36 = vector.broadcast %cst_14 : f32 to vector<8x32xf32>
    %37 = arith.mulf %36, %35 : vector<8x32xf32>
    %cst_15 = arith.constant 5.000000e-01 : f32
    %38 = vector.broadcast %cst_15 : f32 to vector<8x32xf32>
    %39 = arith.addf %37, %38 : vector<8x32xf32>
    %40 = vector.extract_strided_slice %34 {offsets = [0, 32], sizes = [8, 32], strides = [1, 1]} : vector<8x128xf32> to vector<8x32xf32>
    %cst_16 = arith.constant 5.000000e-01 : f32
    %41 = vector.broadcast %cst_16 : f32 to vector<8x32xf32>
    %42 = arith.mulf %41, %40 : vector<8x32xf32>
    %cst_17 = arith.constant 5.000000e-01 : f32
    %43 = vector.broadcast %cst_17 : f32 to vector<8x32xf32>
    %44 = arith.addf %42, %43 : vector<8x32xf32>
    %45 = vector.extract_strided_slice %34 {offsets = [0, 64], sizes = [8, 32], strides = [1, 1]} : vector<8x128xf32> to vector<8x32xf32>
    %46 = vector.extract_strided_slice %34 {offsets = [0, 96], sizes = [8, 32], strides = [1, 1]} : vector<8x128xf32> to vector<8x32xf32>
    %cst_18 = arith.constant 5.000000e-01 : f32
    %47 = vector.broadcast %cst_18 : f32 to vector<8x32xf32>
    %48 = arith.mulf %47, %46 : vector<8x32xf32>
    %cst_19 = arith.constant 5.000000e-01 : f32
    %49 = vector.broadcast %cst_19 : f32 to vector<8x32xf32>
    %50 = arith.addf %48, %49 : vector<8x32xf32>
    %51 = arith.mulf %44, %20 : vector<8x32xf32>
    %52 = arith.mulf %39, %45 : vector<8x32xf32>
    %53 = arith.addf %51, %52 : vector<8x32xf32>
    %54 = math.tanh %53 : vector<8x32xf32>
    %55 = arith.mulf %50, %54 : vector<8x32xf32>
    %56 = arith.truncf %55 : vector<8x32xf32> to vector<8x32xbf16>
    %cst_20 = arith.constant dense<0.000000e+00> : vector<8x128xf32>
    %57 = tpu.matmul %56, %2, %cst_20 {dimension_numbers = #tpu.dot_dimension_numbers<[1], [0], [0], [1], [0, 0, 1, 1], [], []>} : vector<8x32xbf16>, vector<32x128xbf16>, vector<8x128xf32> -> vector<8x128xf32>
    %58 = vector.extract_strided_slice %23 {offsets = [0, 128], sizes = [8, 128], strides = [1, 1]} : vector<8x256xf32> to vector<8x128xf32>
    %59 = arith.addf %57, %58 : vector<8x128xf32>
    %60 = arith.addf %59, %8 : vector<8x128xf32>
    %61 = arith.mulf %60, %19 : vector<8x128xf32>
    %62 = math.tanh %61 : vector<8x128xf32>
    %63 = vector.extract_strided_slice %62 {offsets = [0, 0], sizes = [8, 32], strides = [1, 1]} : vector<8x128xf32> to vector<8x32xf32>
    %cst_21 = arith.constant 5.000000e-01 : f32
    %64 = vector.broadcast %cst_21 : f32 to vector<8x32xf32>
    %65 = arith.mulf %64, %63 : vector<8x32xf32>
    %cst_22 = arith.constant 5.000000e-01 : f32
    %66 = vector.broadcast %cst_22 : f32 to vector<8x32xf32>
    %67 = arith.addf %65, %66 : vector<8x32xf32>
    %68 = vector.extract_strided_slice %62 {offsets = [0, 32], sizes = [8, 32], strides = [1, 1]} : vector<8x128xf32> to vector<8x32xf32>
    %cst_23 = arith.constant 5.000000e-01 : f32
    %69 = vector.broadcast %cst_23 : f32 to vector<8x32xf32>
    %70 = arith.mulf %69, %68 : vector<8x32xf32>
    %cst_24 = arith.constant 5.000000e-01 : f32
    %71 = vector.broadcast %cst_24 : f32 to vector<8x32xf32>
    %72 = arith.addf %70, %71 : vector<8x32xf32>
    %73 = vector.extract_strided_slice %62 {offsets = [0, 64], sizes = [8, 32], strides = [1, 1]} : vector<8x128xf32> to vector<8x32xf32>
    %74 = vector.extract_strided_slice %62 {offsets = [0, 96], sizes = [8, 32], strides = [1, 1]} : vector<8x128xf32> to vector<8x32xf32>
    %cst_25 = arith.constant 5.000000e-01 : f32
    %75 = vector.broadcast %cst_25 : f32 to vector<8x32xf32>
    %76 = arith.mulf %75, %74 : vector<8x32xf32>
    %cst_26 = arith.constant 5.000000e-01 : f32
    %77 = vector.broadcast %cst_26 : f32 to vector<8x32xf32>
    %78 = arith.addf %76, %77 : vector<8x32xf32>
    %79 = arith.mulf %72, %20 : vector<8x32xf32>
    %80 = arith.mulf %67, %73 : vector<8x32xf32>
    %81 = arith.addf %79, %80 : vector<8x32xf32>
    %82 = math.tanh %81 : vector<8x32xf32>
    %83 = arith.mulf %78, %82 : vector<8x32xf32>
    %c1_i32 = arith.constant 1 : i32
    %84 = tpu.concatenate %55, %83 in 1 : vector<8x32xf32>, vector<8x32xf32> -> vector<8x64xf32>
    %85 = arith.truncf %84 : vector<8x64xf32> to vector<8x64xbf16>
    %cst_27 = arith.constant dense<0.000000e+00> : vector<8x256xf32>
    %86 = tpu.matmul %85, %1, %cst_27 {dimension_numbers = #tpu.dot_dimension_numbers<[1], [0], [0], [1], [0, 0, 1, 1], [], []>} : vector<8x64xbf16>, vector<64x256xbf16>, vector<8x256xf32> -> vector<8x256xf32>
    %87 = arith.index_cast %c1_i32 : i32 to index
    %c0_28 = arith.constant 0 : index
    %c0_29 = arith.constant 0 : index
    %88 = vector.load %arg0[%87, %c0_28, %c0_29] : memref<8x8x1xf32, #tpu.memory_space<vmem>>, vector<1x8x1xf32>
    %89 = vector.shape_cast %88 : vector<1x8x1xf32> to vector<8x1xf32>
    %90 = vector.broadcast %89 : vector<8x1xf32> to vector<8x128xf32>
    %91 = vector.broadcast %0 : vector<1x128xf32> to vector<8x128xf32>
    %92 = arith.mulf %90, %91 : vector<8x128xf32>
    %93 = arith.addf %92, %5 : vector<8x128xf32>
    %94 = vector.extract_strided_slice %86 {offsets = [0, 0], sizes = [8, 128], strides = [1, 1]} : vector<8x256xf32> to vector<8x128xf32>
    %95 = arith.addf %93, %94 : vector<8x128xf32>
    %96 = arith.mulf %95, %19 : vector<8x128xf32>
    %97 = math.tanh %96 : vector<8x128xf32>
    %98 = vector.extract_strided_slice %97 {offsets = [0, 0], sizes = [8, 32], strides = [1, 1]} : vector<8x128xf32> to vector<8x32xf32>
    %cst_30 = arith.constant 5.000000e-01 : f32
    %99 = vector.broadcast %cst_30 : f32 to vector<8x32xf32>
    %100 = arith.mulf %99, %98 : vector<8x32xf32>
    %cst_31 = arith.constant 5.000000e-01 : f32
    %101 = vector.broadcast %cst_31 : f32 to vector<8x32xf32>
    %102 = arith.addf %100, %101 : vector<8x32xf32>
    %103 = vector.extract_strided_slice %97 {offsets = [0, 32], sizes = [8, 32], strides = [1, 1]} : vector<8x128xf32> to vector<8x32xf32>
    %cst_32 = arith.constant 5.000000e-01 : f32
    %104 = vector.broadcast %cst_32 : f32 to vector<8x32xf32>
    %105 = arith.mulf %104, %103 : vector<8x32xf32>
    %cst_33 = arith.constant 5.000000e-01 : f32
    %106 = vector.broadcast %cst_33 : f32 to vector<8x32xf32>
    %107 = arith.addf %105, %106 : vector<8x32xf32>
    %108 = vector.extract_strided_slice %97 {offsets = [0, 64], sizes = [8, 32], strides = [1, 1]} : vector<8x128xf32> to vector<8x32xf32>
    %109 = vector.extract_strided_slice %97 {offsets = [0, 96], sizes = [8, 32], strides = [1, 1]} : vector<8x128xf32> to vector<8x32xf32>
    %cst_34 = arith.constant 5.000000e-01 : f32
    %110 = vector.broadcast %cst_34 : f32 to vector<8x32xf32>
    %111 = arith.mulf %110, %109 : vector<8x32xf32>
    %cst_35 = arith.constant 5.000000e-01 : f32
    %112 = vector.broadcast %cst_35 : f32 to vector<8x32xf32>
    %113 = arith.addf %111, %112 : vector<8x32xf32>
    %114 = arith.mulf %107, %53 : vector<8x32xf32>
    %115 = arith.mulf %102, %108 : vector<8x32xf32>
    %116 = arith.addf %114, %115 : vector<8x32xf32>
    %117 = math.tanh %116 : vector<8x32xf32>
    %118 = arith.mulf %113, %117 : vector<8x32xf32>
    %119 = arith.truncf %118 : vector<8x32xf32> to vector<8x32xbf16>
    %cst_36 = arith.constant dense<0.000000e+00> : vector<8x128xf32>
    %120 = tpu.matmul %119, %2, %cst_36 {dimension_numbers = #tpu.dot_dimension_numbers<[1], [0], [0], [1], [0, 0, 1, 1], [], []>} : vector<8x32xbf16>, vector<32x128xbf16>, vector<8x128xf32> -> vector<8x128xf32>
    %121 = vector.extract_strided_slice %86 {offsets = [0, 128], sizes = [8, 128], strides = [1, 1]} : vector<8x256xf32> to vector<8x128xf32>
    %122 = arith.addf %120, %121 : vector<8x128xf32>
    %123 = arith.addf %122, %8 : vector<8x128xf32>
    %124 = arith.mulf %123, %19 : vector<8x128xf32>
    %125 = math.tanh %124 : vector<8x128xf32>
    %126 = vector.extract_strided_slice %125 {offsets = [0, 0], sizes = [8, 32], strides = [1, 1]} : vector<8x128xf32> to vector<8x32xf32>
    %cst_37 = arith.constant 5.000000e-01 : f32
    %127 = vector.broadcast %cst_37 : f32 to vector<8x32xf32>
    %128 = arith.mulf %127, %126 : vector<8x32xf32>
    %cst_38 = arith.constant 5.000000e-01 : f32
    %129 = vector.broadcast %cst_38 : f32 to vector<8x32xf32>
    %130 = arith.addf %128, %129 : vector<8x32xf32>
    %131 = vector.extract_strided_slice %125 {offsets = [0, 32], sizes = [8, 32], strides = [1, 1]} : vector<8x128xf32> to vector<8x32xf32>
    %cst_39 = arith.constant 5.000000e-01 : f32
    %132 = vector.broadcast %cst_39 : f32 to vector<8x32xf32>
    %133 = arith.mulf %132, %131 : vector<8x32xf32>
    %cst_40 = arith.constant 5.000000e-01 : f32
    %134 = vector.broadcast %cst_40 : f32 to vector<8x32xf32>
    %135 = arith.addf %133, %134 : vector<8x32xf32>
    %136 = vector.extract_strided_slice %125 {offsets = [0, 64], sizes = [8, 32], strides = [1, 1]} : vector<8x128xf32> to vector<8x32xf32>
    %137 = vector.extract_strided_slice %125 {offsets = [0, 96], sizes = [8, 32], strides = [1, 1]} : vector<8x128xf32> to vector<8x32xf32>
    %cst_41 = arith.constant 5.000000e-01 : f32
    %138 = vector.broadcast %cst_41 : f32 to vector<8x32xf32>
    %139 = arith.mulf %138, %137 : vector<8x32xf32>
    %cst_42 = arith.constant 5.000000e-01 : f32
    %140 = vector.broadcast %cst_42 : f32 to vector<8x32xf32>
    %141 = arith.addf %139, %140 : vector<8x32xf32>
    %142 = arith.mulf %135, %81 : vector<8x32xf32>
    %143 = arith.mulf %130, %136 : vector<8x32xf32>
    %144 = arith.addf %142, %143 : vector<8x32xf32>
    %145 = math.tanh %144 : vector<8x32xf32>
    %146 = arith.mulf %141, %145 : vector<8x32xf32>
    %c2_i32 = arith.constant 2 : i32
    %147 = tpu.concatenate %118, %146 in 1 : vector<8x32xf32>, vector<8x32xf32> -> vector<8x64xf32>
    %148 = arith.truncf %147 : vector<8x64xf32> to vector<8x64xbf16>
    %cst_43 = arith.constant dense<0.000000e+00> : vector<8x256xf32>
    %149 = tpu.matmul %148, %1, %cst_43 {dimension_numbers = #tpu.dot_dimension_numbers<[1], [0], [0], [1], [0, 0, 1, 1], [], []>} : vector<8x64xbf16>, vector<64x256xbf16>, vector<8x256xf32> -> vector<8x256xf32>
    %150 = arith.index_cast %c2_i32 : i32 to index
    %c0_44 = arith.constant 0 : index
    %c0_45 = arith.constant 0 : index
    %151 = vector.load %arg0[%150, %c0_44, %c0_45] : memref<8x8x1xf32, #tpu.memory_space<vmem>>, vector<1x8x1xf32>
    %152 = vector.shape_cast %151 : vector<1x8x1xf32> to vector<8x1xf32>
    %153 = vector.broadcast %152 : vector<8x1xf32> to vector<8x128xf32>
    %154 = vector.broadcast %0 : vector<1x128xf32> to vector<8x128xf32>
    %155 = arith.mulf %153, %154 : vector<8x128xf32>
    %156 = arith.addf %155, %5 : vector<8x128xf32>
    %157 = vector.extract_strided_slice %149 {offsets = [0, 0], sizes = [8, 128], strides = [1, 1]} : vector<8x256xf32> to vector<8x128xf32>
    %158 = arith.addf %156, %157 : vector<8x128xf32>
    %159 = arith.mulf %158, %19 : vector<8x128xf32>
    %160 = math.tanh %159 : vector<8x128xf32>
    %161 = vector.extract_strided_slice %160 {offsets = [0, 0], sizes = [8, 32], strides = [1, 1]} : vector<8x128xf32> to vector<8x32xf32>
    %cst_46 = arith.constant 5.000000e-01 : f32
    %162 = vector.broadcast %cst_46 : f32 to vector<8x32xf32>
    %163 = arith.mulf %162, %161 : vector<8x32xf32>
    %cst_47 = arith.constant 5.000000e-01 : f32
    %164 = vector.broadcast %cst_47 : f32 to vector<8x32xf32>
    %165 = arith.addf %163, %164 : vector<8x32xf32>
    %166 = vector.extract_strided_slice %160 {offsets = [0, 32], sizes = [8, 32], strides = [1, 1]} : vector<8x128xf32> to vector<8x32xf32>
    %cst_48 = arith.constant 5.000000e-01 : f32
    %167 = vector.broadcast %cst_48 : f32 to vector<8x32xf32>
    %168 = arith.mulf %167, %166 : vector<8x32xf32>
    %cst_49 = arith.constant 5.000000e-01 : f32
    %169 = vector.broadcast %cst_49 : f32 to vector<8x32xf32>
    %170 = arith.addf %168, %169 : vector<8x32xf32>
    %171 = vector.extract_strided_slice %160 {offsets = [0, 64], sizes = [8, 32], strides = [1, 1]} : vector<8x128xf32> to vector<8x32xf32>
    %172 = vector.extract_strided_slice %160 {offsets = [0, 96], sizes = [8, 32], strides = [1, 1]} : vector<8x128xf32> to vector<8x32xf32>
    %cst_50 = arith.constant 5.000000e-01 : f32
    %173 = vector.broadcast %cst_50 : f32 to vector<8x32xf32>
    %174 = arith.mulf %173, %172 : vector<8x32xf32>
    %cst_51 = arith.constant 5.000000e-01 : f32
    %175 = vector.broadcast %cst_51 : f32 to vector<8x32xf32>
    %176 = arith.addf %174, %175 : vector<8x32xf32>
    %177 = arith.mulf %170, %116 : vector<8x32xf32>
    %178 = arith.mulf %165, %171 : vector<8x32xf32>
    %179 = arith.addf %177, %178 : vector<8x32xf32>
    %180 = math.tanh %179 : vector<8x32xf32>
    %181 = arith.mulf %176, %180 : vector<8x32xf32>
    %182 = arith.truncf %181 : vector<8x32xf32> to vector<8x32xbf16>
    %cst_52 = arith.constant dense<0.000000e+00> : vector<8x128xf32>
    %183 = tpu.matmul %182, %2, %cst_52 {dimension_numbers = #tpu.dot_dimension_numbers<[1], [0], [0], [1], [0, 0, 1, 1], [], []>} : vector<8x32xbf16>, vector<32x128xbf16>, vector<8x128xf32> -> vector<8x128xf32>
    %184 = vector.extract_strided_slice %149 {offsets = [0, 128], sizes = [8, 128], strides = [1, 1]} : vector<8x256xf32> to vector<8x128xf32>
    %185 = arith.addf %183, %184 : vector<8x128xf32>
    %186 = arith.addf %185, %8 : vector<8x128xf32>
    %187 = arith.mulf %186, %19 : vector<8x128xf32>
    %188 = math.tanh %187 : vector<8x128xf32>
    %189 = vector.extract_strided_slice %188 {offsets = [0, 0], sizes = [8, 32], strides = [1, 1]} : vector<8x128xf32> to vector<8x32xf32>
    %cst_53 = arith.constant 5.000000e-01 : f32
    %190 = vector.broadcast %cst_53 : f32 to vector<8x32xf32>
    %191 = arith.mulf %190, %189 : vector<8x32xf32>
    %cst_54 = arith.constant 5.000000e-01 : f32
    %192 = vector.broadcast %cst_54 : f32 to vector<8x32xf32>
    %193 = arith.addf %191, %192 : vector<8x32xf32>
    %194 = vector.extract_strided_slice %188 {offsets = [0, 32], sizes = [8, 32], strides = [1, 1]} : vector<8x128xf32> to vector<8x32xf32>
    %cst_55 = arith.constant 5.000000e-01 : f32
    %195 = vector.broadcast %cst_55 : f32 to vector<8x32xf32>
    %196 = arith.mulf %195, %194 : vector<8x32xf32>
    %cst_56 = arith.constant 5.000000e-01 : f32
    %197 = vector.broadcast %cst_56 : f32 to vector<8x32xf32>
    %198 = arith.addf %196, %197 : vector<8x32xf32>
    %199 = vector.extract_strided_slice %188 {offsets = [0, 64], sizes = [8, 32], strides = [1, 1]} : vector<8x128xf32> to vector<8x32xf32>
    %200 = vector.extract_strided_slice %188 {offsets = [0, 96], sizes = [8, 32], strides = [1, 1]} : vector<8x128xf32> to vector<8x32xf32>
    %cst_57 = arith.constant 5.000000e-01 : f32
    %201 = vector.broadcast %cst_57 : f32 to vector<8x32xf32>
    %202 = arith.mulf %201, %200 : vector<8x32xf32>
    %cst_58 = arith.constant 5.000000e-01 : f32
    %203 = vector.broadcast %cst_58 : f32 to vector<8x32xf32>
    %204 = arith.addf %202, %203 : vector<8x32xf32>
    %205 = arith.mulf %198, %144 : vector<8x32xf32>
    %206 = arith.mulf %193, %199 : vector<8x32xf32>
    %207 = arith.addf %205, %206 : vector<8x32xf32>
    %208 = math.tanh %207 : vector<8x32xf32>
    %209 = arith.mulf %204, %208 : vector<8x32xf32>
    %c3_i32 = arith.constant 3 : i32
    %210 = tpu.concatenate %181, %209 in 1 : vector<8x32xf32>, vector<8x32xf32> -> vector<8x64xf32>
    %211 = arith.truncf %210 : vector<8x64xf32> to vector<8x64xbf16>
    %cst_59 = arith.constant dense<0.000000e+00> : vector<8x256xf32>
    %212 = tpu.matmul %211, %1, %cst_59 {dimension_numbers = #tpu.dot_dimension_numbers<[1], [0], [0], [1], [0, 0, 1, 1], [], []>} : vector<8x64xbf16>, vector<64x256xbf16>, vector<8x256xf32> -> vector<8x256xf32>
    %213 = arith.index_cast %c3_i32 : i32 to index
    %c0_60 = arith.constant 0 : index
    %c0_61 = arith.constant 0 : index
    %214 = vector.load %arg0[%213, %c0_60, %c0_61] : memref<8x8x1xf32, #tpu.memory_space<vmem>>, vector<1x8x1xf32>
    %215 = vector.shape_cast %214 : vector<1x8x1xf32> to vector<8x1xf32>
    %216 = vector.broadcast %215 : vector<8x1xf32> to vector<8x128xf32>
    %217 = vector.broadcast %0 : vector<1x128xf32> to vector<8x128xf32>
    %218 = arith.mulf %216, %217 : vector<8x128xf32>
    %219 = arith.addf %218, %5 : vector<8x128xf32>
    %220 = vector.extract_strided_slice %212 {offsets = [0, 0], sizes = [8, 128], strides = [1, 1]} : vector<8x256xf32> to vector<8x128xf32>
    %221 = arith.addf %219, %220 : vector<8x128xf32>
    %222 = arith.mulf %221, %19 : vector<8x128xf32>
    %223 = math.tanh %222 : vector<8x128xf32>
    %224 = vector.extract_strided_slice %223 {offsets = [0, 0], sizes = [8, 32], strides = [1, 1]} : vector<8x128xf32> to vector<8x32xf32>
    %cst_62 = arith.constant 5.000000e-01 : f32
    %225 = vector.broadcast %cst_62 : f32 to vector<8x32xf32>
    %226 = arith.mulf %225, %224 : vector<8x32xf32>
    %cst_63 = arith.constant 5.000000e-01 : f32
    %227 = vector.broadcast %cst_63 : f32 to vector<8x32xf32>
    %228 = arith.addf %226, %227 : vector<8x32xf32>
    %229 = vector.extract_strided_slice %223 {offsets = [0, 32], sizes = [8, 32], strides = [1, 1]} : vector<8x128xf32> to vector<8x32xf32>
    %cst_64 = arith.constant 5.000000e-01 : f32
    %230 = vector.broadcast %cst_64 : f32 to vector<8x32xf32>
    %231 = arith.mulf %230, %229 : vector<8x32xf32>
    %cst_65 = arith.constant 5.000000e-01 : f32
    %232 = vector.broadcast %cst_65 : f32 to vector<8x32xf32>
    %233 = arith.addf %231, %232 : vector<8x32xf32>
    %234 = vector.extract_strided_slice %223 {offsets = [0, 64], sizes = [8, 32], strides = [1, 1]} : vector<8x128xf32> to vector<8x32xf32>
    %235 = vector.extract_strided_slice %223 {offsets = [0, 96], sizes = [8, 32], strides = [1, 1]} : vector<8x128xf32> to vector<8x32xf32>
    %cst_66 = arith.constant 5.000000e-01 : f32
    %236 = vector.broadcast %cst_66 : f32 to vector<8x32xf32>
    %237 = arith.mulf %236, %235 : vector<8x32xf32>
    %cst_67 = arith.constant 5.000000e-01 : f32
    %238 = vector.broadcast %cst_67 : f32 to vector<8x32xf32>
    %239 = arith.addf %237, %238 : vector<8x32xf32>
    %240 = arith.mulf %233, %179 : vector<8x32xf32>
    %241 = arith.mulf %228, %234 : vector<8x32xf32>
    %242 = arith.addf %240, %241 : vector<8x32xf32>
    %243 = math.tanh %242 : vector<8x32xf32>
    %244 = arith.mulf %239, %243 : vector<8x32xf32>
    %245 = arith.truncf %244 : vector<8x32xf32> to vector<8x32xbf16>
    %cst_68 = arith.constant dense<0.000000e+00> : vector<8x128xf32>
    %246 = tpu.matmul %245, %2, %cst_68 {dimension_numbers = #tpu.dot_dimension_numbers<[1], [0], [0], [1], [0, 0, 1, 1], [], []>} : vector<8x32xbf16>, vector<32x128xbf16>, vector<8x128xf32> -> vector<8x128xf32>
    %247 = vector.extract_strided_slice %212 {offsets = [0, 128], sizes = [8, 128], strides = [1, 1]} : vector<8x256xf32> to vector<8x128xf32>
    %248 = arith.addf %246, %247 : vector<8x128xf32>
    %249 = arith.addf %248, %8 : vector<8x128xf32>
    %250 = arith.mulf %249, %19 : vector<8x128xf32>
    %251 = math.tanh %250 : vector<8x128xf32>
    %252 = vector.extract_strided_slice %251 {offsets = [0, 0], sizes = [8, 32], strides = [1, 1]} : vector<8x128xf32> to vector<8x32xf32>
    %cst_69 = arith.constant 5.000000e-01 : f32
    %253 = vector.broadcast %cst_69 : f32 to vector<8x32xf32>
    %254 = arith.mulf %253, %252 : vector<8x32xf32>
    %cst_70 = arith.constant 5.000000e-01 : f32
    %255 = vector.broadcast %cst_70 : f32 to vector<8x32xf32>
    %256 = arith.addf %254, %255 : vector<8x32xf32>
    %257 = vector.extract_strided_slice %251 {offsets = [0, 32], sizes = [8, 32], strides = [1, 1]} : vector<8x128xf32> to vector<8x32xf32>
    %cst_71 = arith.constant 5.000000e-01 : f32
    %258 = vector.broadcast %cst_71 : f32 to vector<8x32xf32>
    %259 = arith.mulf %258, %257 : vector<8x32xf32>
    %cst_72 = arith.constant 5.000000e-01 : f32
    %260 = vector.broadcast %cst_72 : f32 to vector<8x32xf32>
    %261 = arith.addf %259, %260 : vector<8x32xf32>
    %262 = vector.extract_strided_slice %251 {offsets = [0, 64], sizes = [8, 32], strides = [1, 1]} : vector<8x128xf32> to vector<8x32xf32>
    %263 = vector.extract_strided_slice %251 {offsets = [0, 96], sizes = [8, 32], strides = [1, 1]} : vector<8x128xf32> to vector<8x32xf32>
    %cst_73 = arith.constant 5.000000e-01 : f32
    %264 = vector.broadcast %cst_73 : f32 to vector<8x32xf32>
    %265 = arith.mulf %264, %263 : vector<8x32xf32>
    %cst_74 = arith.constant 5.000000e-01 : f32
    %266 = vector.broadcast %cst_74 : f32 to vector<8x32xf32>
    %267 = arith.addf %265, %266 : vector<8x32xf32>
    %268 = arith.mulf %261, %207 : vector<8x32xf32>
    %269 = arith.mulf %256, %262 : vector<8x32xf32>
    %270 = arith.addf %268, %269 : vector<8x32xf32>
    %271 = math.tanh %270 : vector<8x32xf32>
    %272 = arith.mulf %267, %271 : vector<8x32xf32>
    %c4_i32 = arith.constant 4 : i32
    %273 = tpu.concatenate %244, %272 in 1 : vector<8x32xf32>, vector<8x32xf32> -> vector<8x64xf32>
    %274 = arith.truncf %273 : vector<8x64xf32> to vector<8x64xbf16>
    %cst_75 = arith.constant dense<0.000000e+00> : vector<8x256xf32>
    %275 = tpu.matmul %274, %1, %cst_75 {dimension_numbers = #tpu.dot_dimension_numbers<[1], [0], [0], [1], [0, 0, 1, 1], [], []>} : vector<8x64xbf16>, vector<64x256xbf16>, vector<8x256xf32> -> vector<8x256xf32>
    %276 = arith.index_cast %c4_i32 : i32 to index
    %c0_76 = arith.constant 0 : index
    %c0_77 = arith.constant 0 : index
    %277 = vector.load %arg0[%276, %c0_76, %c0_77] : memref<8x8x1xf32, #tpu.memory_space<vmem>>, vector<1x8x1xf32>
    %278 = vector.shape_cast %277 : vector<1x8x1xf32> to vector<8x1xf32>
    %279 = vector.broadcast %278 : vector<8x1xf32> to vector<8x128xf32>
    %280 = vector.broadcast %0 : vector<1x128xf32> to vector<8x128xf32>
    %281 = arith.mulf %279, %280 : vector<8x128xf32>
    %282 = arith.addf %281, %5 : vector<8x128xf32>
    %283 = vector.extract_strided_slice %275 {offsets = [0, 0], sizes = [8, 128], strides = [1, 1]} : vector<8x256xf32> to vector<8x128xf32>
    %284 = arith.addf %282, %283 : vector<8x128xf32>
    %285 = arith.mulf %284, %19 : vector<8x128xf32>
    %286 = math.tanh %285 : vector<8x128xf32>
    %287 = vector.extract_strided_slice %286 {offsets = [0, 0], sizes = [8, 32], strides = [1, 1]} : vector<8x128xf32> to vector<8x32xf32>
    %cst_78 = arith.constant 5.000000e-01 : f32
    %288 = vector.broadcast %cst_78 : f32 to vector<8x32xf32>
    %289 = arith.mulf %288, %287 : vector<8x32xf32>
    %cst_79 = arith.constant 5.000000e-01 : f32
    %290 = vector.broadcast %cst_79 : f32 to vector<8x32xf32>
    %291 = arith.addf %289, %290 : vector<8x32xf32>
    %292 = vector.extract_strided_slice %286 {offsets = [0, 32], sizes = [8, 32], strides = [1, 1]} : vector<8x128xf32> to vector<8x32xf32>
    %cst_80 = arith.constant 5.000000e-01 : f32
    %293 = vector.broadcast %cst_80 : f32 to vector<8x32xf32>
    %294 = arith.mulf %293, %292 : vector<8x32xf32>
    %cst_81 = arith.constant 5.000000e-01 : f32
    %295 = vector.broadcast %cst_81 : f32 to vector<8x32xf32>
    %296 = arith.addf %294, %295 : vector<8x32xf32>
    %297 = vector.extract_strided_slice %286 {offsets = [0, 64], sizes = [8, 32], strides = [1, 1]} : vector<8x128xf32> to vector<8x32xf32>
    %298 = vector.extract_strided_slice %286 {offsets = [0, 96], sizes = [8, 32], strides = [1, 1]} : vector<8x128xf32> to vector<8x32xf32>
    %cst_82 = arith.constant 5.000000e-01 : f32
    %299 = vector.broadcast %cst_82 : f32 to vector<8x32xf32>
    %300 = arith.mulf %299, %298 : vector<8x32xf32>
    %cst_83 = arith.constant 5.000000e-01 : f32
    %301 = vector.broadcast %cst_83 : f32 to vector<8x32xf32>
    %302 = arith.addf %300, %301 : vector<8x32xf32>
    %303 = arith.mulf %296, %242 : vector<8x32xf32>
    %304 = arith.mulf %291, %297 : vector<8x32xf32>
    %305 = arith.addf %303, %304 : vector<8x32xf32>
    %306 = math.tanh %305 : vector<8x32xf32>
    %307 = arith.mulf %302, %306 : vector<8x32xf32>
    %308 = arith.truncf %307 : vector<8x32xf32> to vector<8x32xbf16>
    %cst_84 = arith.constant dense<0.000000e+00> : vector<8x128xf32>
    %309 = tpu.matmul %308, %2, %cst_84 {dimension_numbers = #tpu.dot_dimension_numbers<[1], [0], [0], [1], [0, 0, 1, 1], [], []>} : vector<8x32xbf16>, vector<32x128xbf16>, vector<8x128xf32> -> vector<8x128xf32>
    %310 = vector.extract_strided_slice %275 {offsets = [0, 128], sizes = [8, 128], strides = [1, 1]} : vector<8x256xf32> to vector<8x128xf32>
    %311 = arith.addf %309, %310 : vector<8x128xf32>
    %312 = arith.addf %311, %8 : vector<8x128xf32>
    %313 = arith.mulf %312, %19 : vector<8x128xf32>
    %314 = math.tanh %313 : vector<8x128xf32>
    %315 = vector.extract_strided_slice %314 {offsets = [0, 0], sizes = [8, 32], strides = [1, 1]} : vector<8x128xf32> to vector<8x32xf32>
    %cst_85 = arith.constant 5.000000e-01 : f32
    %316 = vector.broadcast %cst_85 : f32 to vector<8x32xf32>
    %317 = arith.mulf %316, %315 : vector<8x32xf32>
    %cst_86 = arith.constant 5.000000e-01 : f32
    %318 = vector.broadcast %cst_86 : f32 to vector<8x32xf32>
    %319 = arith.addf %317, %318 : vector<8x32xf32>
    %320 = vector.extract_strided_slice %314 {offsets = [0, 32], sizes = [8, 32], strides = [1, 1]} : vector<8x128xf32> to vector<8x32xf32>
    %cst_87 = arith.constant 5.000000e-01 : f32
    %321 = vector.broadcast %cst_87 : f32 to vector<8x32xf32>
    %322 = arith.mulf %321, %320 : vector<8x32xf32>
    %cst_88 = arith.constant 5.000000e-01 : f32
    %323 = vector.broadcast %cst_88 : f32 to vector<8x32xf32>
    %324 = arith.addf %322, %323 : vector<8x32xf32>
    %325 = vector.extract_strided_slice %314 {offsets = [0, 64], sizes = [8, 32], strides = [1, 1]} : vector<8x128xf32> to vector<8x32xf32>
    %326 = vector.extract_strided_slice %314 {offsets = [0, 96], sizes = [8, 32], strides = [1, 1]} : vector<8x128xf32> to vector<8x32xf32>
    %cst_89 = arith.constant 5.000000e-01 : f32
    %327 = vector.broadcast %cst_89 : f32 to vector<8x32xf32>
    %328 = arith.mulf %327, %326 : vector<8x32xf32>
    %cst_90 = arith.constant 5.000000e-01 : f32
    %329 = vector.broadcast %cst_90 : f32 to vector<8x32xf32>
    %330 = arith.addf %328, %329 : vector<8x32xf32>
    %331 = arith.mulf %324, %270 : vector<8x32xf32>
    %332 = arith.mulf %319, %325 : vector<8x32xf32>
    %333 = arith.addf %331, %332 : vector<8x32xf32>
    %334 = math.tanh %333 : vector<8x32xf32>
    %335 = arith.mulf %330, %334 : vector<8x32xf32>
    %c5_i32 = arith.constant 5 : i32
    %336 = tpu.concatenate %307, %335 in 1 : vector<8x32xf32>, vector<8x32xf32> -> vector<8x64xf32>
    %337 = arith.truncf %336 : vector<8x64xf32> to vector<8x64xbf16>
    %cst_91 = arith.constant dense<0.000000e+00> : vector<8x256xf32>
    %338 = tpu.matmul %337, %1, %cst_91 {dimension_numbers = #tpu.dot_dimension_numbers<[1], [0], [0], [1], [0, 0, 1, 1], [], []>} : vector<8x64xbf16>, vector<64x256xbf16>, vector<8x256xf32> -> vector<8x256xf32>
    %339 = arith.index_cast %c5_i32 : i32 to index
    %c0_92 = arith.constant 0 : index
    %c0_93 = arith.constant 0 : index
    %340 = vector.load %arg0[%339, %c0_92, %c0_93] : memref<8x8x1xf32, #tpu.memory_space<vmem>>, vector<1x8x1xf32>
    %341 = vector.shape_cast %340 : vector<1x8x1xf32> to vector<8x1xf32>
    %342 = vector.broadcast %341 : vector<8x1xf32> to vector<8x128xf32>
    %343 = vector.broadcast %0 : vector<1x128xf32> to vector<8x128xf32>
    %344 = arith.mulf %342, %343 : vector<8x128xf32>
    %345 = arith.addf %344, %5 : vector<8x128xf32>
    %346 = vector.extract_strided_slice %338 {offsets = [0, 0], sizes = [8, 128], strides = [1, 1]} : vector<8x256xf32> to vector<8x128xf32>
    %347 = arith.addf %345, %346 : vector<8x128xf32>
    %348 = arith.mulf %347, %19 : vector<8x128xf32>
    %349 = math.tanh %348 : vector<8x128xf32>
    %350 = vector.extract_strided_slice %349 {offsets = [0, 0], sizes = [8, 32], strides = [1, 1]} : vector<8x128xf32> to vector<8x32xf32>
    %cst_94 = arith.constant 5.000000e-01 : f32
    %351 = vector.broadcast %cst_94 : f32 to vector<8x32xf32>
    %352 = arith.mulf %351, %350 : vector<8x32xf32>
    %cst_95 = arith.constant 5.000000e-01 : f32
    %353 = vector.broadcast %cst_95 : f32 to vector<8x32xf32>
    %354 = arith.addf %352, %353 : vector<8x32xf32>
    %355 = vector.extract_strided_slice %349 {offsets = [0, 32], sizes = [8, 32], strides = [1, 1]} : vector<8x128xf32> to vector<8x32xf32>
    %cst_96 = arith.constant 5.000000e-01 : f32
    %356 = vector.broadcast %cst_96 : f32 to vector<8x32xf32>
    %357 = arith.mulf %356, %355 : vector<8x32xf32>
    %cst_97 = arith.constant 5.000000e-01 : f32
    %358 = vector.broadcast %cst_97 : f32 to vector<8x32xf32>
    %359 = arith.addf %357, %358 : vector<8x32xf32>
    %360 = vector.extract_strided_slice %349 {offsets = [0, 64], sizes = [8, 32], strides = [1, 1]} : vector<8x128xf32> to vector<8x32xf32>
    %361 = vector.extract_strided_slice %349 {offsets = [0, 96], sizes = [8, 32], strides = [1, 1]} : vector<8x128xf32> to vector<8x32xf32>
    %cst_98 = arith.constant 5.000000e-01 : f32
    %362 = vector.broadcast %cst_98 : f32 to vector<8x32xf32>
    %363 = arith.mulf %362, %361 : vector<8x32xf32>
    %cst_99 = arith.constant 5.000000e-01 : f32
    %364 = vector.broadcast %cst_99 : f32 to vector<8x32xf32>
    %365 = arith.addf %363, %364 : vector<8x32xf32>
    %366 = arith.mulf %359, %305 : vector<8x32xf32>
    %367 = arith.mulf %354, %360 : vector<8x32xf32>
    %368 = arith.addf %366, %367 : vector<8x32xf32>
    %369 = math.tanh %368 : vector<8x32xf32>
    %370 = arith.mulf %365, %369 : vector<8x32xf32>
    %371 = arith.truncf %370 : vector<8x32xf32> to vector<8x32xbf16>
    %cst_100 = arith.constant dense<0.000000e+00> : vector<8x128xf32>
    %372 = tpu.matmul %371, %2, %cst_100 {dimension_numbers = #tpu.dot_dimension_numbers<[1], [0], [0], [1], [0, 0, 1, 1], [], []>} : vector<8x32xbf16>, vector<32x128xbf16>, vector<8x128xf32> -> vector<8x128xf32>
    %373 = vector.extract_strided_slice %338 {offsets = [0, 128], sizes = [8, 128], strides = [1, 1]} : vector<8x256xf32> to vector<8x128xf32>
    %374 = arith.addf %372, %373 : vector<8x128xf32>
    %375 = arith.addf %374, %8 : vector<8x128xf32>
    %376 = arith.mulf %375, %19 : vector<8x128xf32>
    %377 = math.tanh %376 : vector<8x128xf32>
    %378 = vector.extract_strided_slice %377 {offsets = [0, 0], sizes = [8, 32], strides = [1, 1]} : vector<8x128xf32> to vector<8x32xf32>
    %cst_101 = arith.constant 5.000000e-01 : f32
    %379 = vector.broadcast %cst_101 : f32 to vector<8x32xf32>
    %380 = arith.mulf %379, %378 : vector<8x32xf32>
    %cst_102 = arith.constant 5.000000e-01 : f32
    %381 = vector.broadcast %cst_102 : f32 to vector<8x32xf32>
    %382 = arith.addf %380, %381 : vector<8x32xf32>
    %383 = vector.extract_strided_slice %377 {offsets = [0, 32], sizes = [8, 32], strides = [1, 1]} : vector<8x128xf32> to vector<8x32xf32>
    %cst_103 = arith.constant 5.000000e-01 : f32
    %384 = vector.broadcast %cst_103 : f32 to vector<8x32xf32>
    %385 = arith.mulf %384, %383 : vector<8x32xf32>
    %cst_104 = arith.constant 5.000000e-01 : f32
    %386 = vector.broadcast %cst_104 : f32 to vector<8x32xf32>
    %387 = arith.addf %385, %386 : vector<8x32xf32>
    %388 = vector.extract_strided_slice %377 {offsets = [0, 64], sizes = [8, 32], strides = [1, 1]} : vector<8x128xf32> to vector<8x32xf32>
    %389 = vector.extract_strided_slice %377 {offsets = [0, 96], sizes = [8, 32], strides = [1, 1]} : vector<8x128xf32> to vector<8x32xf32>
    %cst_105 = arith.constant 5.000000e-01 : f32
    %390 = vector.broadcast %cst_105 : f32 to vector<8x32xf32>
    %391 = arith.mulf %390, %389 : vector<8x32xf32>
    %cst_106 = arith.constant 5.000000e-01 : f32
    %392 = vector.broadcast %cst_106 : f32 to vector<8x32xf32>
    %393 = arith.addf %391, %392 : vector<8x32xf32>
    %394 = arith.mulf %387, %333 : vector<8x32xf32>
    %395 = arith.mulf %382, %388 : vector<8x32xf32>
    %396 = arith.addf %394, %395 : vector<8x32xf32>
    %397 = math.tanh %396 : vector<8x32xf32>
    %398 = arith.mulf %393, %397 : vector<8x32xf32>
    %c6_i32 = arith.constant 6 : i32
    %399 = tpu.concatenate %370, %398 in 1 : vector<8x32xf32>, vector<8x32xf32> -> vector<8x64xf32>
    %400 = arith.truncf %399 : vector<8x64xf32> to vector<8x64xbf16>
    %cst_107 = arith.constant dense<0.000000e+00> : vector<8x256xf32>
    %401 = tpu.matmul %400, %1, %cst_107 {dimension_numbers = #tpu.dot_dimension_numbers<[1], [0], [0], [1], [0, 0, 1, 1], [], []>} : vector<8x64xbf16>, vector<64x256xbf16>, vector<8x256xf32> -> vector<8x256xf32>
    %402 = arith.index_cast %c6_i32 : i32 to index
    %c0_108 = arith.constant 0 : index
    %c0_109 = arith.constant 0 : index
    %403 = vector.load %arg0[%402, %c0_108, %c0_109] : memref<8x8x1xf32, #tpu.memory_space<vmem>>, vector<1x8x1xf32>
    %404 = vector.shape_cast %403 : vector<1x8x1xf32> to vector<8x1xf32>
    %405 = vector.broadcast %404 : vector<8x1xf32> to vector<8x128xf32>
    %406 = vector.broadcast %0 : vector<1x128xf32> to vector<8x128xf32>
    %407 = arith.mulf %405, %406 : vector<8x128xf32>
    %408 = arith.addf %407, %5 : vector<8x128xf32>
    %409 = vector.extract_strided_slice %401 {offsets = [0, 0], sizes = [8, 128], strides = [1, 1]} : vector<8x256xf32> to vector<8x128xf32>
    %410 = arith.addf %408, %409 : vector<8x128xf32>
    %411 = arith.mulf %410, %19 : vector<8x128xf32>
    %412 = math.tanh %411 : vector<8x128xf32>
    %413 = vector.extract_strided_slice %412 {offsets = [0, 0], sizes = [8, 32], strides = [1, 1]} : vector<8x128xf32> to vector<8x32xf32>
    %cst_110 = arith.constant 5.000000e-01 : f32
    %414 = vector.broadcast %cst_110 : f32 to vector<8x32xf32>
    %415 = arith.mulf %414, %413 : vector<8x32xf32>
    %cst_111 = arith.constant 5.000000e-01 : f32
    %416 = vector.broadcast %cst_111 : f32 to vector<8x32xf32>
    %417 = arith.addf %415, %416 : vector<8x32xf32>
    %418 = vector.extract_strided_slice %412 {offsets = [0, 32], sizes = [8, 32], strides = [1, 1]} : vector<8x128xf32> to vector<8x32xf32>
    %cst_112 = arith.constant 5.000000e-01 : f32
    %419 = vector.broadcast %cst_112 : f32 to vector<8x32xf32>
    %420 = arith.mulf %419, %418 : vector<8x32xf32>
    %cst_113 = arith.constant 5.000000e-01 : f32
    %421 = vector.broadcast %cst_113 : f32 to vector<8x32xf32>
    %422 = arith.addf %420, %421 : vector<8x32xf32>
    %423 = vector.extract_strided_slice %412 {offsets = [0, 64], sizes = [8, 32], strides = [1, 1]} : vector<8x128xf32> to vector<8x32xf32>
    %424 = vector.extract_strided_slice %412 {offsets = [0, 96], sizes = [8, 32], strides = [1, 1]} : vector<8x128xf32> to vector<8x32xf32>
    %cst_114 = arith.constant 5.000000e-01 : f32
    %425 = vector.broadcast %cst_114 : f32 to vector<8x32xf32>
    %426 = arith.mulf %425, %424 : vector<8x32xf32>
    %cst_115 = arith.constant 5.000000e-01 : f32
    %427 = vector.broadcast %cst_115 : f32 to vector<8x32xf32>
    %428 = arith.addf %426, %427 : vector<8x32xf32>
    %429 = arith.mulf %422, %368 : vector<8x32xf32>
    %430 = arith.mulf %417, %423 : vector<8x32xf32>
    %431 = arith.addf %429, %430 : vector<8x32xf32>
    %432 = math.tanh %431 : vector<8x32xf32>
    %433 = arith.mulf %428, %432 : vector<8x32xf32>
    %434 = arith.truncf %433 : vector<8x32xf32> to vector<8x32xbf16>
    %cst_116 = arith.constant dense<0.000000e+00> : vector<8x128xf32>
    %435 = tpu.matmul %434, %2, %cst_116 {dimension_numbers = #tpu.dot_dimension_numbers<[1], [0], [0], [1], [0, 0, 1, 1], [], []>} : vector<8x32xbf16>, vector<32x128xbf16>, vector<8x128xf32> -> vector<8x128xf32>
    %436 = vector.extract_strided_slice %401 {offsets = [0, 128], sizes = [8, 128], strides = [1, 1]} : vector<8x256xf32> to vector<8x128xf32>
    %437 = arith.addf %435, %436 : vector<8x128xf32>
    %438 = arith.addf %437, %8 : vector<8x128xf32>
    %439 = arith.mulf %438, %19 : vector<8x128xf32>
    %440 = math.tanh %439 : vector<8x128xf32>
    %441 = vector.extract_strided_slice %440 {offsets = [0, 0], sizes = [8, 32], strides = [1, 1]} : vector<8x128xf32> to vector<8x32xf32>
    %cst_117 = arith.constant 5.000000e-01 : f32
    %442 = vector.broadcast %cst_117 : f32 to vector<8x32xf32>
    %443 = arith.mulf %442, %441 : vector<8x32xf32>
    %cst_118 = arith.constant 5.000000e-01 : f32
    %444 = vector.broadcast %cst_118 : f32 to vector<8x32xf32>
    %445 = arith.addf %443, %444 : vector<8x32xf32>
    %446 = vector.extract_strided_slice %440 {offsets = [0, 32], sizes = [8, 32], strides = [1, 1]} : vector<8x128xf32> to vector<8x32xf32>
    %cst_119 = arith.constant 5.000000e-01 : f32
    %447 = vector.broadcast %cst_119 : f32 to vector<8x32xf32>
    %448 = arith.mulf %447, %446 : vector<8x32xf32>
    %cst_120 = arith.constant 5.000000e-01 : f32
    %449 = vector.broadcast %cst_120 : f32 to vector<8x32xf32>
    %450 = arith.addf %448, %449 : vector<8x32xf32>
    %451 = vector.extract_strided_slice %440 {offsets = [0, 64], sizes = [8, 32], strides = [1, 1]} : vector<8x128xf32> to vector<8x32xf32>
    %452 = vector.extract_strided_slice %440 {offsets = [0, 96], sizes = [8, 32], strides = [1, 1]} : vector<8x128xf32> to vector<8x32xf32>
    %cst_121 = arith.constant 5.000000e-01 : f32
    %453 = vector.broadcast %cst_121 : f32 to vector<8x32xf32>
    %454 = arith.mulf %453, %452 : vector<8x32xf32>
    %cst_122 = arith.constant 5.000000e-01 : f32
    %455 = vector.broadcast %cst_122 : f32 to vector<8x32xf32>
    %456 = arith.addf %454, %455 : vector<8x32xf32>
    %457 = arith.mulf %450, %396 : vector<8x32xf32>
    %458 = arith.mulf %445, %451 : vector<8x32xf32>
    %459 = arith.addf %457, %458 : vector<8x32xf32>
    %460 = math.tanh %459 : vector<8x32xf32>
    %461 = arith.mulf %456, %460 : vector<8x32xf32>
    %c7_i32 = arith.constant 7 : i32
    %462 = tpu.concatenate %433, %461 in 1 : vector<8x32xf32>, vector<8x32xf32> -> vector<8x64xf32>
    %463 = arith.truncf %462 : vector<8x64xf32> to vector<8x64xbf16>
    %cst_123 = arith.constant dense<0.000000e+00> : vector<8x256xf32>
    %464 = tpu.matmul %463, %1, %cst_123 {dimension_numbers = #tpu.dot_dimension_numbers<[1], [0], [0], [1], [0, 0, 1, 1], [], []>} : vector<8x64xbf16>, vector<64x256xbf16>, vector<8x256xf32> -> vector<8x256xf32>
    %465 = arith.index_cast %c7_i32 : i32 to index
    %c0_124 = arith.constant 0 : index
    %c0_125 = arith.constant 0 : index
    %466 = vector.load %arg0[%465, %c0_124, %c0_125] : memref<8x8x1xf32, #tpu.memory_space<vmem>>, vector<1x8x1xf32>
    %467 = vector.shape_cast %466 : vector<1x8x1xf32> to vector<8x1xf32>
    %468 = vector.broadcast %467 : vector<8x1xf32> to vector<8x128xf32>
    %469 = vector.broadcast %0 : vector<1x128xf32> to vector<8x128xf32>
    %470 = arith.mulf %468, %469 : vector<8x128xf32>
    %471 = arith.addf %470, %5 : vector<8x128xf32>
    %472 = vector.extract_strided_slice %464 {offsets = [0, 0], sizes = [8, 128], strides = [1, 1]} : vector<8x256xf32> to vector<8x128xf32>
    %473 = arith.addf %471, %472 : vector<8x128xf32>
    %474 = arith.mulf %473, %19 : vector<8x128xf32>
    %475 = math.tanh %474 : vector<8x128xf32>
    %476 = vector.extract_strided_slice %475 {offsets = [0, 0], sizes = [8, 32], strides = [1, 1]} : vector<8x128xf32> to vector<8x32xf32>
    %cst_126 = arith.constant 5.000000e-01 : f32
    %477 = vector.broadcast %cst_126 : f32 to vector<8x32xf32>
    %478 = arith.mulf %477, %476 : vector<8x32xf32>
    %cst_127 = arith.constant 5.000000e-01 : f32
    %479 = vector.broadcast %cst_127 : f32 to vector<8x32xf32>
    %480 = arith.addf %478, %479 : vector<8x32xf32>
    %481 = vector.extract_strided_slice %475 {offsets = [0, 32], sizes = [8, 32], strides = [1, 1]} : vector<8x128xf32> to vector<8x32xf32>
    %cst_128 = arith.constant 5.000000e-01 : f32
    %482 = vector.broadcast %cst_128 : f32 to vector<8x32xf32>
    %483 = arith.mulf %482, %481 : vector<8x32xf32>
    %cst_129 = arith.constant 5.000000e-01 : f32
    %484 = vector.broadcast %cst_129 : f32 to vector<8x32xf32>
    %485 = arith.addf %483, %484 : vector<8x32xf32>
    %486 = vector.extract_strided_slice %475 {offsets = [0, 64], sizes = [8, 32], strides = [1, 1]} : vector<8x128xf32> to vector<8x32xf32>
    %487 = vector.extract_strided_slice %475 {offsets = [0, 96], sizes = [8, 32], strides = [1, 1]} : vector<8x128xf32> to vector<8x32xf32>
    %cst_130 = arith.constant 5.000000e-01 : f32
    %488 = vector.broadcast %cst_130 : f32 to vector<8x32xf32>
    %489 = arith.mulf %488, %487 : vector<8x32xf32>
    %cst_131 = arith.constant 5.000000e-01 : f32
    %490 = vector.broadcast %cst_131 : f32 to vector<8x32xf32>
    %491 = arith.addf %489, %490 : vector<8x32xf32>
    %492 = arith.mulf %485, %431 : vector<8x32xf32>
    %493 = arith.mulf %480, %486 : vector<8x32xf32>
    %494 = arith.addf %492, %493 : vector<8x32xf32>
    %495 = math.tanh %494 : vector<8x32xf32>
    %496 = arith.mulf %491, %495 : vector<8x32xf32>
    %497 = arith.truncf %496 : vector<8x32xf32> to vector<8x32xbf16>
    %cst_132 = arith.constant dense<0.000000e+00> : vector<8x128xf32>
    %498 = tpu.matmul %497, %2, %cst_132 {dimension_numbers = #tpu.dot_dimension_numbers<[1], [0], [0], [1], [0, 0, 1, 1], [], []>} : vector<8x32xbf16>, vector<32x128xbf16>, vector<8x128xf32> -> vector<8x128xf32>
    %499 = vector.extract_strided_slice %464 {offsets = [0, 128], sizes = [8, 128], strides = [1, 1]} : vector<8x256xf32> to vector<8x128xf32>
    %500 = arith.addf %498, %499 : vector<8x128xf32>
    %501 = arith.addf %500, %8 : vector<8x128xf32>
    %502 = arith.mulf %501, %19 : vector<8x128xf32>
    %503 = math.tanh %502 : vector<8x128xf32>
    %504 = vector.extract_strided_slice %503 {offsets = [0, 0], sizes = [8, 32], strides = [1, 1]} : vector<8x128xf32> to vector<8x32xf32>
    %cst_133 = arith.constant 5.000000e-01 : f32
    %505 = vector.broadcast %cst_133 : f32 to vector<8x32xf32>
    %506 = arith.mulf %505, %504 : vector<8x32xf32>
    %cst_134 = arith.constant 5.000000e-01 : f32
    %507 = vector.broadcast %cst_134 : f32 to vector<8x32xf32>
    %508 = arith.addf %506, %507 : vector<8x32xf32>
    %509 = vector.extract_strided_slice %503 {offsets = [0, 32], sizes = [8, 32], strides = [1, 1]} : vector<8x128xf32> to vector<8x32xf32>
    %cst_135 = arith.constant 5.000000e-01 : f32
    %510 = vector.broadcast %cst_135 : f32 to vector<8x32xf32>
    %511 = arith.mulf %510, %509 : vector<8x32xf32>
    %cst_136 = arith.constant 5.000000e-01 : f32
    %512 = vector.broadcast %cst_136 : f32 to vector<8x32xf32>
    %513 = arith.addf %511, %512 : vector<8x32xf32>
    %514 = vector.extract_strided_slice %503 {offsets = [0, 64], sizes = [8, 32], strides = [1, 1]} : vector<8x128xf32> to vector<8x32xf32>
    %515 = vector.extract_strided_slice %503 {offsets = [0, 96], sizes = [8, 32], strides = [1, 1]} : vector<8x128xf32> to vector<8x32xf32>
    %cst_137 = arith.constant 5.000000e-01 : f32
    %516 = vector.broadcast %cst_137 : f32 to vector<8x32xf32>
    %517 = arith.mulf %516, %515 : vector<8x32xf32>
    %cst_138 = arith.constant 5.000000e-01 : f32
    %518 = vector.broadcast %cst_138 : f32 to vector<8x32xf32>
    %519 = arith.addf %517, %518 : vector<8x32xf32>
    %520 = arith.mulf %513, %459 : vector<8x32xf32>
    %521 = arith.mulf %508, %514 : vector<8x32xf32>
    %522 = arith.addf %520, %521 : vector<8x32xf32>
    %523 = math.tanh %522 : vector<8x32xf32>
    %524 = arith.mulf %519, %523 : vector<8x32xf32>
    %c8_i32 = arith.constant 8 : i32
    %525 = arith.truncf %524 : vector<8x32xf32> to vector<8x32xbf16>
    %c0_139 = arith.constant 0 : index
    %c0_140 = arith.constant 0 : index
    %526 = vector.load %arg6[%c0_139, %c0_140] : memref<32x128xbf16, #tpu.memory_space<vmem>>, vector<32x128xbf16>
    %cst_141 = arith.constant dense<0.000000e+00> : vector<8x128xf32>
    %527 = tpu.matmul %525, %526, %cst_141 {dimension_numbers = #tpu.dot_dimension_numbers<[1], [0], [0], [1], [0, 0, 1, 1], [], []>} : vector<8x32xbf16>, vector<32x128xbf16>, vector<8x128xf32> -> vector<8x128xf32>
    %c0_142 = arith.constant 0 : index
    %c0_143 = arith.constant 0 : index
    %528 = vector.load %arg7[%c0_142, %c0_143] : memref<1x128xf32, #tpu.memory_space<vmem>>, vector<1x128xf32>
    %529 = vector.broadcast %528 : vector<1x128xf32> to vector<8x128xf32>
    %530 = arith.addf %527, %529 : vector<8x128xf32>
    %c0_144 = arith.constant 0 : index
    %c0_145 = arith.constant 0 : index
    %531 = vector.load %arg8[%c0_144, %c0_145] : memref<8x128xf32, #tpu.memory_space<vmem>>, vector<8x128xf32>
    tpu.vector_store %arg8[%c0_144, %c0_145], %530 {strides = array<i32>} : memref<8x128xf32, #tpu.memory_space<vmem>>, vector<8x128xf32>,
    return
  }
}

</mosaic_0001>

<llo_original>
// kernel: tpu_custom_call.1
$region0: #{tpu_custom_call.1}
  #allocation0 [shape = 'u32[]', space=smem, size = 0x4, offset = 0x4, fixed_abs, tag = 'smem constant byte address 0x4 - core index']
  #allocation1 [shape = 'u32[72,128]{1,0:T(1,128)}', space=vmem, size = 0x9000, scoped, tag = 'internal scratch']
  %s0 = inlined_call_operand.vmem [shape: f32[8,8,1], index: 0, kind: input, shape index: {}]
  %s1 = inlined_call_operand.vmem [shape: f32[1,128], index: 1, kind: input, shape index: {}]
  %s2 = inlined_call_operand.vmem [shape: f32[1,128], index: 2, kind: input, shape index: {}]
  %s3 = inlined_call_operand.vmem [shape: bf16[64,256], index: 3, kind: input, shape index: {}]
  %s4 = inlined_call_operand.hbm [shape: bf16[32,128], index: 4, kind: input, shape index: {}]
  %s5 = inlined_call_operand.vmem [shape: f32[1,128], index: 5, kind: input, shape index: {}]
  %s6 = inlined_call_operand.hbm [shape: bf16[32,128], index: 6, kind: input, shape index: {}]
  %s7 = inlined_call_operand.vmem [shape: f32[1,128], index: 7, kind: input, shape index: {}]
  %s8 = inlined_call_operand.hbm [shape: f32[8,128], index: 8, kind: output, shape index: {}]
  %s9 = sld [smem:[#allocation0]]
  $region50: #{tpu_custom_call.1} parent=0
    _
  %s11 = ssub.s32 1, %s9
  %s12 = scalar_select 0, %s11, %s9
  $region1: #{tpu_custom_call.1} parent=0
    #allocation2 [shape = 'u8[8192]{0}', space=vmem, size = 0x2000, scoped, tag = 'input window, operand 4, single buffered']
    #allocation3 [shape = 's32[1]{0}', space=sflag, size = 0x4, scoped, tag = 'scoped memory for tpu_custom_call.1']
    #allocation4 [shape = 's32[1]{0}', space=sflag, size = 0x4, scoped, tag = 'scoped memory for tpu_custom_call.1']
    #allocation5 [shape = 'u8[8192]{0}', space=vmem, size = 0x2000, scoped, tag = 'input window, operand 6, single buffered']
    #allocation6 [shape = 's32[1]{0}', space=sflag, size = 0x4, scoped, tag = 'scoped memory for tpu_custom_call.1']
    #allocation7 [shape = 'u8[4096]{0}', space=vmem, size = 0x1000, scoped, tag = 'output window, operand 0, single buffered']
    %13 = vsyncpa [#allocation3], 0
    %14 = vsyncpa [#allocation6], 0
    %15 = vsyncpa [#allocation4], 0
    // Predicated region
    $region2: #{tpu_custom_call.1} parent=1 // pred_check
      _
    $region3: #{tpu_custom_call.1} parent=1 // pred_check_branch
      %17 = sbr.rel (0) target = $region5
    $region4: #{tpu_custom_call.1} parent=1 // pred_region
      _
    $region5: #{tpu_custom_call.1} parent=1 // pred_fallthru
      _
    // Predicated region
    $region6: #{tpu_custom_call.1} parent=1 // pred_check
      _
    $region7: #{tpu_custom_call.1} parent=1 // pred_check_branch
      %19 = sbr.rel (0) target = $region9
    $region8: #{tpu_custom_call.1} parent=1 // pred_region
      _
    $region9: #{tpu_custom_call.1} parent=1 // pred_fallthru
      _
    // Predicated region
    $region10: #{tpu_custom_call.1} parent=1 // pred_check
      _
    $region11: #{tpu_custom_call.1} parent=1 // pred_check_branch
      %21 = sbr.rel (0) target = $region13
    $region12: #{tpu_custom_call.1} parent=1 // pred_region
      _
    $region13: #{tpu_custom_call.1} parent=1 // pred_fallthru
      _
    // Predicated region
    $region14: #{tpu_custom_call.1} parent=1 // pred_check
      _
    $region15: #{tpu_custom_call.1} parent=1 // pred_check_branch
      %23 = sbr.rel (0) target = $region17
    $region16: #{tpu_custom_call.1} parent=1 // pred_region
      _
    $region17: #{tpu_custom_call.1} parent=1 // pred_fallthru
      _
    // Predicated region
    $region18: #{tpu_custom_call.1} parent=1 // pred_check
      _
    $region19: #{tpu_custom_call.1} parent=1 // pred_check_branch
      %25 = sbr.rel (0) target = $region21
    $region20: #{tpu_custom_call.1} parent=1 // pred_region
      %27 = vsyncadd [#allocation3], 0
      %s28 = sshll.u32 %s4, 4
      %s29 = int_to_ptr.hbm [resolvable:$true] %s28
      %s30 = sshll.u32 [#allocation2], 4
      %s31 = int_to_ptr.vmem [resolvable:$true] %s30
      %36 = dma.hbm_to_vmem [thread:$0]  %s29, 256, %s31, [#allocation3], 64, 64, 4
    $region21: #{tpu_custom_call.1} parent=1 // pred_fallthru
      _
    // Predicated region
    $region22: #{tpu_custom_call.1} parent=1 // pred_check
      _
    $region23: #{tpu_custom_call.1} parent=1 // pred_check_branch
      %38 = sbr.rel (0) target = $region25
    $region24: #{tpu_custom_call.1} parent=1 // pred_region
      _
    $region25: #{tpu_custom_call.1} parent=1 // pred_fallthru
      _
    // Predicated region
    $region26: #{tpu_custom_call.1} parent=1 // pred_check
      _
    $region27: #{tpu_custom_call.1} parent=1 // pred_check_branch
      %40 = sbr.rel (0) target = $region29
    $region28: #{tpu_custom_call.1} parent=1 // pred_region
      %42 = vsyncadd [#allocation6], 0
      %s43 = sshll.u32 %s6, 4
      %s44 = int_to_ptr.hbm [resolvable:$true] %s43
      %s45 = sshll.u32 [#allocation5], 4
      %s46 = int_to_ptr.vmem [resolvable:$true] %s45
      %51 = dma.hbm_to_vmem [thread:$0]  %s44, 256, %s46, [#allocation6], 64, 64, 4
    $region29: #{tpu_custom_call.1} parent=1 // pred_fallthru
      _
    // Predicated region
    $region30: #{tpu_custom_call.1} parent=1 // pred_check
      _
    $region31: #{tpu_custom_call.1} parent=1 // pred_check_branch
      %53 = sbr.rel (0) target = $region33
    $region32: #{tpu_custom_call.1} parent=1 // pred_region
      _
    $region33: #{tpu_custom_call.1} parent=1 // pred_fallthru
      _
    // Predicated region
    $region34: #{tpu_custom_call.1} parent=1 // pred_check
      _
    $region35: #{tpu_custom_call.1} parent=1 // pred_check_branch
      %55 = sbr.rel (0) target = $region37
    $region36: #{tpu_custom_call.1} parent=1 // pred_region
      %57 = dma.done [#allocation3], 256
    $region37: #{tpu_custom_call.1} parent=1 // pred_fallthru
      _
    // Predicated region
    $region38: #{tpu_custom_call.1} parent=1 // pred_check
      _
    $region39: #{tpu_custom_call.1} parent=1 // pred_check_branch
      %59 = sbr.rel (0) target = $region41
    $region40: #{tpu_custom_call.1} parent=1 // pred_region
      %61 = dma.done [#allocation6], 256
    $region41: #{tpu_custom_call.1} parent=1 // pred_fallthru
      _
    %v63 = vld [vmem:[%s1] sm:$0x1]
    %v64 = vld [vmem:[%s3] sm:$0xff]
    %v65 = vld [vmem:[%s3 + $0x8] sm:$0xff]
    %v66 = vld [vmem:[%s3 + $0x10] sm:$0xff]
    %v67 = vld [vmem:[%s3 + $0x18] sm:$0xff]
    %v68 = vld [vmem:[%s3 + $0x20] sm:$0xff]
    %v69 = vld [vmem:[%s3 + $0x28] sm:$0xff]
    %v70 = vld [vmem:[%s3 + $0x30] sm:$0xff]
    %v71 = vld [vmem:[%s3 + $0x38] sm:$0xff]
    %v72 = vld [vmem:[#allocation2] sm:$0xf]
    %v73 = vld [vmem:[#allocation2 + $0x4] sm:$0xf]
    %v74 = vld [vmem:[#allocation2 + $0x8] sm:$0xf]
    %v75 = vld [vmem:[#allocation2 + $0xc] sm:$0xf]
    %v76 = vld [vmem:[%s2] sm:$0x1]
    %v78 = vperm.slane %v76, 0
    %v80 = vld [vmem:[%s5] sm:$0x1]
    %v82 = vperm.slane %v80, 0
    %v84 = vlaneseq
    %v85 = vand.u32 %v84, 127
    %vm86 = vcmp.ge.s32.totalorder %v85, 64
    %vm87 = vcmp.lt.s32.totalorder %v85, 96
    %vm88 = vmand %vm86, %vm87
    %v89 = vsel %vm88, 1.0, 0.5
    %v90 = vpack.c.bf16 0.0, 0.0
    %v99 = vunpack.c.l.b16 %v64
    %v100 = vunpack.c.h.b16 %v64
    %v101 = vunpack.c.l.b16 %v65
    %v102 = vunpack.c.h.b16 %v65
    %v103 = vunpack.c.l.b16 %v66
    %v104 = vunpack.c.h.b16 %v66
    %v105 = vunpack.c.l.b16 %v67
    %v106 = vunpack.c.h.b16 %v67
    %v107 = vunpack.c.l.b16 %v68
    %v108 = vunpack.c.h.b16 %v68
    %v109 = vunpack.c.l.b16 %v69
    %v110 = vunpack.c.h.b16 %v69
    %v111 = vunpack.c.l.b16 %v70
    %v112 = vunpack.c.h.b16 %v70
    %v113 = vunpack.c.l.b16 %v71
    %v114 = vunpack.c.h.b16 %v71
    %v115 = vpack.c.b16 %v101, %v99
    %v116 = vpack.c.b16 %v102, %v100
    %v117 = vpack.c.b16 %v105, %v103
    %v118 = vpack.c.b16 %v106, %v104
    %v119 = vpack.c.b16 %v109, %v107
    %v120 = vpack.c.b16 %v110, %v108
    %v121 = vpack.c.b16 %v113, %v111
    %v122 = vpack.c.b16 %v114, %v112
    %vm131 = vcmask 523264
    %v133 = vsel %vm131, %v90, 0
    %135 = vmatpush.bf16.msra.mxu0 0
    %136 = vmatpush.bf16.msra.mxu0 0
    %137 = vmatpush.bf16.msra.mxu0 0
    %138 = vmatpush.bf16.msra.mxu0 0
    %139 = vmatpush.bf16.msra.mxu0 %v121
    %140 = vmatpush.bf16.msra.mxu0 %v119
    %141 = vmatpush.bf16.msra.mxu0 %v117
    %142 = vmatpush.bf16.msra.mxu0 %v115
    %143 = vmatmul.bf16.gmra.mxu0 %v133
    %v144 = vpop.f32.mrf.mxu0
    %v145 = vadd.f32 0.0, %v144
    %v146 = vpop.f32.mrf.mxu0
    %147 = vdwg.mxu0
    %148 = vmatpush.bf16.msra.mxu0 0
    %149 = vmatpush.bf16.msra.mxu0 0
    %150 = vmatpush.bf16.msra.mxu0 0
    %151 = vmatpush.bf16.msra.mxu0 0
    %152 = vmatpush.bf16.msra.mxu0 %v122
    %153 = vmatpush.bf16.msra.mxu0 %v120
    %154 = vmatpush.bf16.msra.mxu0 %v118
    %155 = vmatpush.bf16.msra.mxu0 %v116
    %156 = vmatmul.bf16.gmra.mxu0 %v133
    %v157 = vpop.f32.mrf.mxu0
    %v158 = vadd.f32 0.0, %v157
    %v159 = vpop.f32.mrf.mxu0
    %160 = vdwg.mxu0
    %v161 = vld [vmem:[%s0] sm:$0xff]
    %163 = vset.pattern.permute.xlu0 0
    %164 = vperm.xlu0 %163, %v161
    %v165 = vpop.permute.xlu0 %164
    %v168 = vperm.slane %v63, 0
    %v170 = vmul.f32 %v165, %v168
    %v171 = vadd.f32 %v170, %v78
    %v172 = vadd.f32 %v171, %v145
    %v173 = vmul.f32 %v172, %v89
    %v174 = vtanh.pop %v173
    %v175 = vmul.f32 %v174, 0.5
    %v176 = vadd.f32 %v175, 0.5
    %v177 = vmul.f32 %v176, 0.0
    %179 = vrot.lane.b32.xlu0 %v174, 64
    %v180 = vpop.permute.xlu0 %179
    %v182 = vmul.f32 %v176, %v180
    %184 = vrot.lane.b32.xlu0 %v182, 32
    %v185 = vpop.permute.xlu0 %184
    %v187 = vadd.f32 %v177, %v185
    %v188 = vtanh.pop %v187
    %190 = vrot.lane.b32.xlu0 %v188, 64
    %v191 = vpop.permute.xlu0 %190
    %v193 = vmul.f32 %v176, %v191
    %v194 = vpack.c.bf16 %v193, %v193
    %196 = vrot.lane.b32.xlu0 %v194, 32
    %v197 = vpop.permute.xlu0 %196
    %v202 = vunpack.c.l.b16 %v72
    %v203 = vunpack.c.l.b16 %v73
    %v204 = vunpack.c.l.b16 %v74
    %v205 = vunpack.c.l.b16 %v75
    %v206 = vpack.c.b16 %v203, %v202
    %v207 = vpack.c.b16 %v205, %v204
    %vm210 = vcmask 261120
    %v212 = vsel %vm210, %v197, 0
    %214 = vmatpush.bf16.msra.mxu0 0
    %215 = vmatpush.bf16.msra.mxu0 0
    %216 = vmatpush.bf16.msra.mxu0 0
    %217 = vmatpush.bf16.msra.mxu0 0
    %218 = vmatpush.bf16.msra.mxu0 0
    %219 = vmatpush.bf16.msra.mxu0 0
    %220 = vmatpush.bf16.msra.mxu0 %v207
    %221 = vmatpush.bf16.msra.mxu0 %v206
    %222 = vmatmul.bf16.gmra.mxu0 %v212
    %v223 = vpop.f32.mrf.mxu0
    %v224 = vadd.f32 %v158, %v223
    %v225 = vpop.f32.mrf.mxu0
    %226 = vdwg.mxu0
    %v227 = vadd.f32 %v224, %v82
    %v228 = vmul.f32 %v227, %v89
    %v229 = vtanh.pop %v228
    %v230 = vmul.f32 %v229, 0.5
    %v231 = vadd.f32 %v230, 0.5
    %v232 = vmul.f32 %v231, 0.0
    %234 = vrot.lane.b32.xlu0 %v229, 64
    %v235 = vpop.permute.xlu0 %234
    %v237 = vmul.f32 %v231, %v235
    %239 = vrot.lane.b32.xlu0 %v237, 32
    %v240 = vpop.permute.xlu0 %239
    %v242 = vadd.f32 %v232, %v240
    %v243 = vtanh.pop %v242
    %245 = vrot.lane.b32.xlu0 %v243, 64
    %v246 = vpop.permute.xlu0 %245
    %v248 = vmul.f32 %v231, %v246
    %250 = vrot.lane.b32.xlu0 %v193, 32
    %v251 = vpop.permute.xlu0 %250
    %254 = vrot.lane.b32.xlu0 %v248, 64
    %v255 = vpop.permute.xlu0 %254
    %v257 = vsel %vm210, %v251, %v255
    %v258 = vpack.c.bf16 %v257, %v257
    %v260 = vsel %vm131, %v258, 0
    %262 = vmatpush.bf16.msra.mxu0 0
    %263 = vmatpush.bf16.msra.mxu0 0
    %264 = vmatpush.bf16.msra.mxu0 0
    %265 = vmatpush.bf16.msra.mxu0 0
    %266 = vmatpush.bf16.msra.mxu0 %v121
    %267 = vmatpush.bf16.msra.mxu0 %v119
    %268 = vmatpush.bf16.msra.mxu0 %v117
    %269 = vmatpush.bf16.msra.mxu0 %v115
    %270 = vmatmul.bf16.gmra.mxu0 %v260
    %v271 = vpop.f32.mrf.mxu0
    %v272 = vadd.f32 0.0, %v271
    %v273 = vpop.f32.mrf.mxu0
    %274 = vdwg.mxu0
    %275 = vmatpush.bf16.msra.mxu0 0
    %276 = vmatpush.bf16.msra.mxu0 0
    %277 = vmatpush.bf16.msra.mxu0 0
    %278 = vmatpush.bf16.msra.mxu0 0
    %279 = vmatpush.bf16.msra.mxu0 %v122
    %280 = vmatpush.bf16.msra.mxu0 %v120
    %281 = vmatpush.bf16.msra.mxu0 %v118
    %282 = vmatpush.bf16.msra.mxu0 %v116
    %283 = vmatmul.bf16.gmra.mxu0 %v260
    %v284 = vpop.f32.mrf.mxu0
    %v285 = vadd.f32 0.0, %v284
    %v286 = vpop.f32.mrf.mxu0
    %287 = vdwg.mxu0
    %s288 = scalar_lea.vmem %s0, 8
    %v289 = vld [vmem:[%s288] sm:$0xff]
    %291 = vset.pattern.permute.xlu0 0
    %292 = vperm.xlu0 %291, %v289
    %v293 = vpop.permute.xlu0 %292
    %v295 = vmul.f32 %v293, %v168
    %v296 = vadd.f32 %v295, %v78
    %v297 = vadd.f32 %v296, %v272
    %v298 = vmul.f32 %v297, %v89
    %v299 = vtanh.pop %v298
    %v300 = vmul.f32 %v299, 0.5
    %v301 = vadd.f32 %v300, 0.5
    %v302 = vmul.f32 %v301, %v187
    %304 = vrot.lane.b32.xlu0 %v299, 64
    %v305 = vpop.permute.xlu0 %304
    %v307 = vmul.f32 %v301, %v305
    %309 = vrot.lane.b32.xlu0 %v307, 32
    %v310 = vpop.permute.xlu0 %309
    %v312 = vadd.f32 %v302, %v310
    %v313 = vtanh.pop %v312
    %315 = vrot.lane.b32.xlu0 %v313, 64
    %v316 = vpop.permute.xlu0 %315
    %v318 = vmul.f32 %v301, %v316
    %v319 = vpack.c.bf16 %v318, %v318
    %321 = vrot.lane.b32.xlu0 %v319, 32
    %v322 = vpop.permute.xlu0 %321
    %v324 = vsel %vm210, %v322, 0
    %326 = vmatpush.bf16.msra.mxu0 0
    %327 = vmatpush.bf16.msra.mxu0 0
    %328 = vmatpush.bf16.msra.mxu0 0
    %329 = vmatpush.bf16.msra.mxu0 0
    %330 = vmatpush.bf16.msra.mxu0 0
    %331 = vmatpush.bf16.msra.mxu0 0
    %332 = vmatpush.bf16.msra.mxu0 %v207
    %333 = vmatpush.bf16.msra.mxu0 %v206
    %334 = vmatmul.bf16.gmra.mxu0 %v324
    %v335 = vpop.f32.mrf.mxu0
    %v336 = vadd.f32 %v285, %v335
    %v337 = vpop.f32.mrf.mxu0
    %338 = vdwg.mxu0
    %v339 = vadd.f32 %v336, %v82
    %v340 = vmul.f32 %v339, %v89
    %v341 = vtanh.pop %v340
    %v342 = vmul.f32 %v341, 0.5
    %v343 = vadd.f32 %v342, 0.5
    %v344 = vmul.f32 %v343, %v242
    %346 = vrot.lane.b32.xlu0 %v341, 64
    %v347 = vpop.permute.xlu0 %346
    %v349 = vmul.f32 %v343, %v347
    %351 = vrot.lane.b32.xlu0 %v349, 32
    %v352 = vpop.permute.xlu0 %351
    %v354 = vadd.f32 %v344, %v352
    %v355 = vtanh.pop %v354
    %357 = vrot.lane.b32.xlu0 %v355, 64
    %v358 = vpop.permute.xlu0 %357
    %v360 = vmul.f32 %v343, %v358
    %362 = vrot.lane.b32.xlu0 %v318, 32
    %v363 = vpop.permute.xlu0 %362
    %366 = vrot.lane.b32.xlu0 %v360, 64
    %v367 = vpop.permute.xlu0 %366
    %v369 = vsel %vm210, %v363, %v367
    %v370 = vpack.c.bf16 %v369, %v369
    %v372 = vsel %vm131, %v370, 0
    %374 = vmatpush.bf16.msra.mxu0 0
    %375 = vmatpush.bf16.msra.mxu0 0
    %376 = vmatpush.bf16.msra.mxu0 0
    %377 = vmatpush.bf16.msra.mxu0 0
    %378 = vmatpush.bf16.msra.mxu0 %v121
    %379 = vmatpush.bf16.msra.mxu0 %v119
    %380 = vmatpush.bf16.msra.mxu0 %v117
    %381 = vmatpush.bf16.msra.mxu0 %v115
    %382 = vmatmul.bf16.gmra.mxu0 %v372
    %v383 = vpop.f32.mrf.mxu0
    %v384 = vadd.f32 0.0, %v383
    %v385 = vpop.f32.mrf.mxu0
    %386 = vdwg.mxu0
    %387 = vmatpush.bf16.msra.mxu0 0
    %388 = vmatpush.bf16.msra.mxu0 0
    %389 = vmatpush.bf16.msra.mxu0 0
    %390 = vmatpush.bf16.msra.mxu0 0
    %391 = vmatpush.bf16.msra.mxu0 %v122
    %392 = vmatpush.bf16.msra.mxu0 %v120
    %393 = vmatpush.bf16.msra.mxu0 %v118
    %394 = vmatpush.bf16.msra.mxu0 %v116
    %395 = vmatmul.bf16.gmra.mxu0 %v372
    %v396 = vpop.f32.mrf.mxu0
    %v397 = vadd.f32 0.0, %v396
    %v398 = vpop.f32.mrf.mxu0
    %399 = vdwg.mxu0
    %s400 = scalar_lea.vmem %s0, 16
    %v401 = vld [vmem:[%s400] sm:$0xff]
    %403 = vset.pattern.permute.xlu0 0
    %404 = vperm.xlu0 %403, %v401
    %v405 = vpop.permute.xlu0 %404
    %v407 = vmul.f32 %v405, %v168
    %v408 = vadd.f32 %v407, %v78
    %v409 = vadd.f32 %v408, %v384
    %v410 = vmul.f32 %v409, %v89
    %v411 = vtanh.pop %v410
    %v412 = vmul.f32 %v411, 0.5
    %v413 = vadd.f32 %v412, 0.5
    %v414 = vmul.f32 %v413, %v312
    %416 = vrot.lane.b32.xlu0 %v411, 64
    %v417 = vpop.permute.xlu0 %416
    %v419 = vmul.f32 %v413, %v417
    %421 = vrot.lane.b32.xlu0 %v419, 32
    %v422 = vpop.permute.xlu0 %421
    %v424 = vadd.f32 %v414, %v422
    %v425 = vtanh.pop %v424
    %427 = vrot.lane.b32.xlu0 %v425, 64
    %v428 = vpop.permute.xlu0 %427
    %v430 = vmul.f32 %v413, %v428
    %v431 = vpack.c.bf16 %v430, %v430
    %433 = vrot.lane.b32.xlu0 %v431, 32
    %v434 = vpop.permute.xlu0 %433
    %v436 = vsel %vm210, %v434, 0
    %438 = vmatpush.bf16.msra.mxu0 0
    %439 = vmatpush.bf16.msra.mxu0 0
    %440 = vmatpush.bf16.msra.mxu0 0
    %441 = vmatpush.bf16.msra.mxu0 0
    %442 = vmatpush.bf16.msra.mxu0 0
    %443 = vmatpush.bf16.msra.mxu0 0
    %444 = vmatpush.bf16.msra.mxu0 %v207
    %445 = vmatpush.bf16.msra.mxu0 %v206
    %446 = vmatmul.bf16.gmra.mxu0 %v436
    %v447 = vpop.f32.mrf.mxu0
    %v448 = vadd.f32 %v397, %v447
    %v449 = vpop.f32.mrf.mxu0
    %450 = vdwg.mxu0
    %v451 = vadd.f32 %v448, %v82
    %v452 = vmul.f32 %v451, %v89
    %v453 = vtanh.pop %v452
    %v454 = vmul.f32 %v453, 0.5
    %v455 = vadd.f32 %v454, 0.5
    %v456 = vmul.f32 %v455, %v354
    %458 = vrot.lane.b32.xlu0 %v453, 64
    %v459 = vpop.permute.xlu0 %458
    %v461 = vmul.f32 %v455, %v459
    %463 = vrot.lane.b32.xlu0 %v461, 32
    %v464 = vpop.permute.xlu0 %463
    %v466 = vadd.f32 %v456, %v464
    %v467 = vtanh.pop %v466
    %469 = vrot.lane.b32.xlu0 %v467, 64
    %v470 = vpop.permute.xlu0 %469
    %v472 = vmul.f32 %v455, %v470
    %474 = vrot.lane.b32.xlu0 %v430, 32
    %v475 = vpop.permute.xlu0 %474
    %478 = vrot.lane.b32.xlu0 %v472, 64
    %v479 = vpop.permute.xlu0 %478
    %v481 = vsel %vm210, %v475, %v479
    %v482 = vpack.c.bf16 %v481, %v481
    %v484 = vsel %vm131, %v482, 0
    %486 = vmatpush.bf16.msra.mxu0 0
    %487 = vmatpush.bf16.msra.mxu0 0
    %488 = vmatpush.bf16.msra.mxu0 0
    %489 = vmatpush.bf16.msra.mxu0 0
    %490 = vmatpush.bf16.msra.mxu0 %v121
    %491 = vmatpush.bf16.msra.mxu0 %v119
    %492 = vmatpush.bf16.msra.mxu0 %v117
    %493 = vmatpush.bf16.msra.mxu0 %v115
    %494 = vmatmul.bf16.gmra.mxu0 %v484
    %v495 = vpop.f32.mrf.mxu0
    %v496 = vadd.f32 0.0, %v495
    %v497 = vpop.f32.mrf.mxu0
    %498 = vdwg.mxu0
    %499 = vmatpush.bf16.msra.mxu0 0
    %500 = vmatpush.bf16.msra.mxu0 0
    %501 = vmatpush.bf16.msra.mxu0 0
    %502 = vmatpush.bf16.msra.mxu0 0
    %503 = vmatpush.bf16.msra.mxu0 %v122
    %504 = vmatpush.bf16.msra.mxu0 %v120
    %505 = vmatpush.bf16.msra.mxu0 %v118
    %506 = vmatpush.bf16.msra.mxu0 %v116
    %507 = vmatmul.bf16.gmra.mxu0 %v484
    %v508 = vpop.f32.mrf.mxu0
    %v509 = vadd.f32 0.0, %v508
    %v510 = vpop.f32.mrf.mxu0
    %511 = vdwg.mxu0
    %s512 = scalar_lea.vmem %s0, 24
    %v513 = vld [vmem:[%s512] sm:$0xff]
    %515 = vset.pattern.permute.xlu0 0
    %516 = vperm.xlu0 %515, %v513
    %v517 = vpop.permute.xlu0 %516
    %v519 = vmul.f32 %v517, %v168
    %v520 = vadd.f32 %v519, %v78
    %v521 = vadd.f32 %v520, %v496
    %v522 = vmul.f32 %v521, %v89
    %v523 = vtanh.pop %v522
    %v524 = vmul.f32 %v523, 0.5
    %v525 = vadd.f32 %v524, 0.5
    %v526 = vmul.f32 %v525, %v424
    %528 = vrot.lane.b32.xlu0 %v523, 64
    %v529 = vpop.permute.xlu0 %528
    %v531 = vmul.f32 %v525, %v529
    %533 = vrot.lane.b32.xlu0 %v531, 32
    %v534 = vpop.permute.xlu0 %533
    %v536 = vadd.f32 %v526, %v534
    %v537 = vtanh.pop %v536
    %539 = vrot.lane.b32.xlu0 %v537, 64
    %v540 = vpop.permute.xlu0 %539
    %v542 = vmul.f32 %v525, %v540
    %v543 = vpack.c.bf16 %v542, %v542
    %545 = vrot.lane.b32.xlu0 %v543, 32
    %v546 = vpop.permute.xlu0 %545
    %v548 = vsel %vm210, %v546, 0
    %550 = vmatpush.bf16.msra.mxu0 0
    %551 = vmatpush.bf16.msra.mxu0 0
    %552 = vmatpush.bf16.msra.mxu0 0
    %553 = vmatpush.bf16.msra.mxu0 0
    %554 = vmatpush.bf16.msra.mxu0 0
    %555 = vmatpush.bf16.msra.mxu0 0
    %556 = vmatpush.bf16.msra.mxu0 %v207
    %557 = vmatpush.bf16.msra.mxu0 %v206
    %558 = vmatmul.bf16.gmra.mxu0 %v548
    %v559 = vpop.f32.mrf.mxu0
    %v560 = vadd.f32 %v509, %v559
    %v561 = vpop.f32.mrf.mxu0
    %562 = vdwg.mxu0
    %v563 = vadd.f32 %v560, %v82
    %v564 = vmul.f32 %v563, %v89
    %v565 = vtanh.pop %v564
    %v566 = vmul.f32 %v565, 0.5
    %v567 = vadd.f32 %v566, 0.5
    %v568 = vmul.f32 %v567, %v466
    %570 = vrot.lane.b32.xlu0 %v565, 64
    %v571 = vpop.permute.xlu0 %570
    %v573 = vmul.f32 %v567, %v571
    %575 = vrot.lane.b32.xlu0 %v573, 32
    %v576 = vpop.permute.xlu0 %575
    %v578 = vadd.f32 %v568, %v576
    %v579 = vtanh.pop %v578
    %581 = vrot.lane.b32.xlu0 %v579, 64
    %v582 = vpop.permute.xlu0 %581
    %v584 = vmul.f32 %v567, %v582
    %586 = vrot.lane.b32.xlu0 %v542, 32
    %v587 = vpop.permute.xlu0 %586
    %590 = vrot.lane.b32.xlu0 %v584, 64
    %v591 = vpop.permute.xlu0 %590
    %v593 = vsel %vm210, %v587, %v591
    %v594 = vpack.c.bf16 %v593, %v593
    %v596 = vsel %vm131, %v594, 0
    %598 = vmatpush.bf16.msra.mxu0 0
    %599 = vmatpush.bf16.msra.mxu0 0
    %600 = vmatpush.bf16.msra.mxu0 0
    %601 = vmatpush.bf16.msra.mxu0 0
    %602 = vmatpush.bf16.msra.mxu0 %v121
    %603 = vmatpush.bf16.msra.mxu0 %v119
    %604 = vmatpush.bf16.msra.mxu0 %v117
    %605 = vmatpush.bf16.msra.mxu0 %v115
    %606 = vmatmul.bf16.gmra.mxu0 %v596
    %v607 = vpop.f32.mrf.mxu0
    %v608 = vadd.f32 0.0, %v607
    %v609 = vpop.f32.mrf.mxu0
    %610 = vdwg.mxu0
    %611 = vmatpush.bf16.msra.mxu0 0
    %612 = vmatpush.bf16.msra.mxu0 0
    %613 = vmatpush.bf16.msra.mxu0 0
    %614 = vmatpush.bf16.msra.mxu0 0
    %615 = vmatpush.bf16.msra.mxu0 %v122
    %616 = vmatpush.bf16.msra.mxu0 %v120
    %617 = vmatpush.bf16.msra.mxu0 %v118
    %618 = vmatpush.bf16.msra.mxu0 %v116
    %619 = vmatmul.bf16.gmra.mxu0 %v596
    %v620 = vpop.f32.mrf.mxu0
    %v621 = vadd.f32 0.0, %v620
    %v622 = vpop.f32.mrf.mxu0
    %623 = vdwg.mxu0
    %s624 = scalar_lea.vmem %s0, 32
    %v625 = vld [vmem:[%s624] sm:$0xff]
    %627 = vset.pattern.permute.xlu0 0
    %628 = vperm.xlu0 %627, %v625
    %v629 = vpop.permute.xlu0 %628
    %v631 = vmul.f32 %v629, %v168
    %v632 = vadd.f32 %v631, %v78
    %v633 = vadd.f32 %v632, %v608
    %v634 = vmul.f32 %v633, %v89
    %v635 = vtanh.pop %v634
    %v636 = vmul.f32 %v635, 0.5
    %v637 = vadd.f32 %v636, 0.5
    %v638 = vmul.f32 %v637, %v536
    %640 = vrot.lane.b32.xlu0 %v635, 64
    %v641 = vpop.permute.xlu0 %640
    %v643 = vmul.f32 %v637, %v641
    %645 = vrot.lane.b32.xlu0 %v643, 32
    %v646 = vpop.permute.xlu0 %645
    %v648 = vadd.f32 %v638, %v646
    %v649 = vtanh.pop %v648
    %651 = vrot.lane.b32.xlu0 %v649, 64
    %v652 = vpop.permute.xlu0 %651
    %v654 = vmul.f32 %v637, %v652
    %v655 = vpack.c.bf16 %v654, %v654
    %657 = vrot.lane.b32.xlu0 %v655, 32
    %v658 = vpop.permute.xlu0 %657
    %v660 = vsel %vm210, %v658, 0
    %662 = vmatpush.bf16.msra.mxu0 0
    %663 = vmatpush.bf16.msra.mxu0 0
    %664 = vmatpush.bf16.msra.mxu0 0
    %665 = vmatpush.bf16.msra.mxu0 0
    %666 = vmatpush.bf16.msra.mxu0 0
    %667 = vmatpush.bf16.msra.mxu0 0
    %668 = vmatpush.bf16.msra.mxu0 %v207
    %669 = vmatpush.bf16.msra.mxu0 %v206
    %670 = vmatmul.bf16.gmra.mxu0 %v660
    %v671 = vpop.f32.mrf.mxu0
    %v672 = vadd.f32 %v621, %v671
    %v673 = vpop.f32.mrf.mxu0
    %674 = vdwg.mxu0
    %v675 = vadd.f32 %v672, %v82
    %v676 = vmul.f32 %v675, %v89
    %v677 = vtanh.pop %v676
    %v678 = vmul.f32 %v677, 0.5
    %v679 = vadd.f32 %v678, 0.5
    %v680 = vmul.f32 %v679, %v578
    %682 = vrot.lane.b32.xlu0 %v677, 64
    %v683 = vpop.permute.xlu0 %682
    %v685 = vmul.f32 %v679, %v683
    %687 = vrot.lane.b32.xlu0 %v685, 32
    %v688 = vpop.permute.xlu0 %687
    %v690 = vadd.f32 %v680, %v688
    %v691 = vtanh.pop %v690
    %693 = vrot.lane.b32.xlu0 %v691, 64
    %v694 = vpop.permute.xlu0 %693
    %v696 = vmul.f32 %v679, %v694
    %698 = vrot.lane.b32.xlu0 %v654, 32
    %v699 = vpop.permute.xlu0 %698
    %702 = vrot.lane.b32.xlu0 %v696, 64
    %v703 = vpop.permute.xlu0 %702
    %v705 = vsel %vm210, %v699, %v703
    %v706 = vpack.c.bf16 %v705, %v705
    %v708 = vsel %vm131, %v706, 0
    %710 = vmatpush.bf16.msra.mxu0 0
    %711 = vmatpush.bf16.msra.mxu0 0
    %712 = vmatpush.bf16.msra.mxu0 0
    %713 = vmatpush.bf16.msra.mxu0 0
    %714 = vmatpush.bf16.msra.mxu0 %v121
    %715 = vmatpush.bf16.msra.mxu0 %v119
    %716 = vmatpush.bf16.msra.mxu0 %v117
    %717 = vmatpush.bf16.msra.mxu0 %v115
    %718 = vmatmul.bf16.gmra.mxu0 %v708
    %v719 = vpop.f32.mrf.mxu0
    %v720 = vadd.f32 0.0, %v719
    %v721 = vpop.f32.mrf.mxu0
    %722 = vdwg.mxu0
    %723 = vmatpush.bf16.msra.mxu0 0
    %724 = vmatpush.bf16.msra.mxu0 0
    %725 = vmatpush.bf16.msra.mxu0 0
    %726 = vmatpush.bf16.msra.mxu0 0
    %727 = vmatpush.bf16.msra.mxu0 %v122
    %728 = vmatpush.bf16.msra.mxu0 %v120
    %729 = vmatpush.bf16.msra.mxu0 %v118
    %730 = vmatpush.bf16.msra.mxu0 %v116
    %731 = vmatmul.bf16.gmra.mxu0 %v708
    %v732 = vpop.f32.mrf.mxu0
    %v733 = vadd.f32 0.0, %v732
    %v734 = vpop.f32.mrf.mxu0
    %735 = vdwg.mxu0
    %s736 = scalar_lea.vmem %s0, 40
    %v737 = vld [vmem:[%s736] sm:$0xff]
    %739 = vset.pattern.permute.xlu0 0
    %740 = vperm.xlu0 %739, %v737
    %v741 = vpop.permute.xlu0 %740
    %v743 = vmul.f32 %v741, %v168
    %v744 = vadd.f32 %v743, %v78
    %v745 = vadd.f32 %v744, %v720
    %v746 = vmul.f32 %v745, %v89
    %v747 = vtanh.pop %v746
    %v748 = vmul.f32 %v747, 0.5
    %v749 = vadd.f32 %v748, 0.5
    %v750 = vmul.f32 %v749, %v648
    %752 = vrot.lane.b32.xlu0 %v747, 64
    %v753 = vpop.permute.xlu0 %752
    %v755 = vmul.f32 %v749, %v753
    %757 = vrot.lane.b32.xlu0 %v755, 32
    %v758 = vpop.permute.xlu0 %757
    %v760 = vadd.f32 %v750, %v758
    %v761 = vtanh.pop %v760
    %763 = vrot.lane.b32.xlu0 %v761, 64
    %v764 = vpop.permute.xlu0 %763
    %v766 = vmul.f32 %v749, %v764
    %v767 = vpack.c.bf16 %v766, %v766
    %769 = vrot.lane.b32.xlu0 %v767, 32
    %v770 = vpop.permute.xlu0 %769
    %v772 = vsel %vm210, %v770, 0
    %774 = vmatpush.bf16.msra.mxu0 0
    %775 = vmatpush.bf16.msra.mxu0 0
    %776 = vmatpush.bf16.msra.mxu0 0
    %777 = vmatpush.bf16.msra.mxu0 0
    %778 = vmatpush.bf16.msra.mxu0 0
    %779 = vmatpush.bf16.msra.mxu0 0
    %780 = vmatpush.bf16.msra.mxu0 %v207
    %781 = vmatpush.bf16.msra.mxu0 %v206
    %782 = vmatmul.bf16.gmra.mxu0 %v772
    %v783 = vpop.f32.mrf.mxu0
    %v784 = vadd.f32 %v733, %v783
    %v785 = vpop.f32.mrf.mxu0
    %786 = vdwg.mxu0
    %v787 = vadd.f32 %v784, %v82
    %v788 = vmul.f32 %v787, %v89
    %v789 = vtanh.pop %v788
    %v790 = vmul.f32 %v789, 0.5
    %v791 = vadd.f32 %v790, 0.5
    %v792 = vmul.f32 %v791, %v690
    %794 = vrot.lane.b32.xlu0 %v789, 64
    %v795 = vpop.permute.xlu0 %794
    %v797 = vmul.f32 %v791, %v795
    %799 = vrot.lane.b32.xlu0 %v797, 32
    %v800 = vpop.permute.xlu0 %799
    %v802 = vadd.f32 %v792, %v800
    %v803 = vtanh.pop %v802
    %805 = vrot.lane.b32.xlu0 %v803, 64
    %v806 = vpop.permute.xlu0 %805
    %v808 = vmul.f32 %v791, %v806
    %810 = vrot.lane.b32.xlu0 %v766, 32
    %v811 = vpop.permute.xlu0 %810
    %814 = vrot.lane.b32.xlu0 %v808, 64
    %v815 = vpop.permute.xlu0 %814
    %v817 = vsel %vm210, %v811, %v815
    %v818 = vpack.c.bf16 %v817, %v817
    %v820 = vsel %vm131, %v818, 0
    %822 = vmatpush.bf16.msra.mxu0 0
    %823 = vmatpush.bf16.msra.mxu0 0
    %824 = vmatpush.bf16.msra.mxu0 0
    %825 = vmatpush.bf16.msra.mxu0 0
    %826 = vmatpush.bf16.msra.mxu0 %v121
    %827 = vmatpush.bf16.msra.mxu0 %v119
    %828 = vmatpush.bf16.msra.mxu0 %v117
    %829 = vmatpush.bf16.msra.mxu0 %v115
    %830 = vmatmul.bf16.gmra.mxu0 %v820
    %v831 = vpop.f32.mrf.mxu0
    %v832 = vadd.f32 0.0, %v831
    %v833 = vpop.f32.mrf.mxu0
    %834 = vdwg.mxu0
    %835 = vmatpush.bf16.msra.mxu0 0
    %836 = vmatpush.bf16.msra.mxu0 0
    %837 = vmatpush.bf16.msra.mxu0 0
    %838 = vmatpush.bf16.msra.mxu0 0
    %839 = vmatpush.bf16.msra.mxu0 %v122
    %840 = vmatpush.bf16.msra.mxu0 %v120
    %841 = vmatpush.bf16.msra.mxu0 %v118
    %842 = vmatpush.bf16.msra.mxu0 %v116
    %843 = vmatmul.bf16.gmra.mxu0 %v820
    %v844 = vpop.f32.mrf.mxu0
    %v845 = vadd.f32 0.0, %v844
    %v846 = vpop.f32.mrf.mxu0
    %847 = vdwg.mxu0
    %s848 = scalar_lea.vmem %s0, 48
    %v849 = vld [vmem:[%s848] sm:$0xff]
    %851 = vset.pattern.permute.xlu0 0
    %852 = vperm.xlu0 %851, %v849
    %v853 = vpop.permute.xlu0 %852
    %v855 = vmul.f32 %v853, %v168
    %v856 = vadd.f32 %v855, %v78
    %v857 = vadd.f32 %v856, %v832
    %v858 = vmul.f32 %v857, %v89
    %v859 = vtanh.pop %v858
    %v860 = vmul.f32 %v859, 0.5
    %v861 = vadd.f32 %v860, 0.5
    %v862 = vmul.f32 %v861, %v760
    %864 = vrot.lane.b32.xlu0 %v859, 64
    %v865 = vpop.permute.xlu0 %864
    %v867 = vmul.f32 %v861, %v865
    %869 = vrot.lane.b32.xlu0 %v867, 32
    %v870 = vpop.permute.xlu0 %869
    %v872 = vadd.f32 %v862, %v870
    %v873 = vtanh.pop %v872
    %875 = vrot.lane.b32.xlu0 %v873, 64
    %v876 = vpop.permute.xlu0 %875
    %v878 = vmul.f32 %v861, %v876
    %v879 = vpack.c.bf16 %v878, %v878
    %881 = vrot.lane.b32.xlu0 %v879, 32
    %v882 = vpop.permute.xlu0 %881
    %v884 = vsel %vm210, %v882, 0
    %886 = vmatpush.bf16.msra.mxu0 0
    %887 = vmatpush.bf16.msra.mxu0 0
    %888 = vmatpush.bf16.msra.mxu0 0
    %889 = vmatpush.bf16.msra.mxu0 0
    %890 = vmatpush.bf16.msra.mxu0 0
    %891 = vmatpush.bf16.msra.mxu0 0
    %892 = vmatpush.bf16.msra.mxu0 %v207
    %893 = vmatpush.bf16.msra.mxu0 %v206
    %894 = vmatmul.bf16.gmra.mxu0 %v884
    %v895 = vpop.f32.mrf.mxu0
    %v896 = vadd.f32 %v845, %v895
    %v897 = vpop.f32.mrf.mxu0
    %898 = vdwg.mxu0
    %v899 = vadd.f32 %v896, %v82
    %v900 = vmul.f32 %v899, %v89
    %v901 = vtanh.pop %v900
    %v902 = vmul.f32 %v901, 0.5
    %v903 = vadd.f32 %v902, 0.5
    %v904 = vmul.f32 %v903, %v802
    %906 = vrot.lane.b32.xlu0 %v901, 64
    %v907 = vpop.permute.xlu0 %906
    %v909 = vmul.f32 %v903, %v907
    %911 = vrot.lane.b32.xlu0 %v909, 32
    %v912 = vpop.permute.xlu0 %911
    %v914 = vadd.f32 %v904, %v912
    %v915 = vtanh.pop %v914
    %917 = vrot.lane.b32.xlu0 %v915, 64
    %v918 = vpop.permute.xlu0 %917
    %v920 = vmul.f32 %v903, %v918
    %922 = vrot.lane.b32.xlu0 %v878, 32
    %v923 = vpop.permute.xlu0 %922
    %926 = vrot.lane.b32.xlu0 %v920, 64
    %v927 = vpop.permute.xlu0 %926
    %v929 = vsel %vm210, %v923, %v927
    %v930 = vpack.c.bf16 %v929, %v929
    %v932 = vsel %vm131, %v930, 0
    %934 = vmatpush.bf16.msra.mxu0 0
    %935 = vmatpush.bf16.msra.mxu0 0
    %936 = vmatpush.bf16.msra.mxu0 0
    %937 = vmatpush.bf16.msra.mxu0 0
    %938 = vmatpush.bf16.msra.mxu0 %v121
    %939 = vmatpush.bf16.msra.mxu0 %v119
    %940 = vmatpush.bf16.msra.mxu0 %v117
    %941 = vmatpush.bf16.msra.mxu0 %v115
    %942 = vmatmul.bf16.gmra.mxu0 %v932
    %v943 = vpop.f32.mrf.mxu0
    %v944 = vadd.f32 0.0, %v943
    %v945 = vpop.f32.mrf.mxu0
    %946 = vdwg.mxu0
    %947 = vmatpush.bf16.msra.mxu0 0
    %948 = vmatpush.bf16.msra.mxu0 0
    %949 = vmatpush.bf16.msra.mxu0 0
    %950 = vmatpush.bf16.msra.mxu0 0
    %951 = vmatpush.bf16.msra.mxu0 %v122
    %952 = vmatpush.bf16.msra.mxu0 %v120
    %953 = vmatpush.bf16.msra.mxu0 %v118
    %954 = vmatpush.bf16.msra.mxu0 %v116
    %955 = vmatmul.bf16.gmra.mxu0 %v932
    %v956 = vpop.f32.mrf.mxu0
    %v957 = vadd.f32 0.0, %v956
    %v958 = vpop.f32.mrf.mxu0
    %959 = vdwg.mxu0
    %s960 = scalar_lea.vmem %s0, 56
    %v961 = vld [vmem:[%s960] sm:$0xff]
    %963 = vset.pattern.permute.xlu0 0
    %964 = vperm.xlu0 %963, %v961
    %v965 = vpop.permute.xlu0 %964
    %v967 = vmul.f32 %v965, %v168
    %v968 = vadd.f32 %v967, %v78
    %v969 = vadd.f32 %v968, %v944
    %v970 = vmul.f32 %v969, %v89
    %v971 = vtanh.pop %v970
    %v972 = vmul.f32 %v971, 0.5
    %v973 = vadd.f32 %v972, 0.5
    %v974 = vmul.f32 %v973, %v872
    %976 = vrot.lane.b32.xlu0 %v971, 64
    %v977 = vpop.permute.xlu0 %976
    %v979 = vmul.f32 %v973, %v977
    %981 = vrot.lane.b32.xlu0 %v979, 32
    %v982 = vpop.permute.xlu0 %981
    %v984 = vadd.f32 %v974, %v982
    %v985 = vtanh.pop %v984
    %987 = vrot.lane.b32.xlu0 %v985, 64
    %v988 = vpop.permute.xlu0 %987
    %v990 = vmul.f32 %v973, %v988
    %v991 = vpack.c.bf16 %v990, %v990
    %993 = vrot.lane.b32.xlu0 %v991, 32
    %v994 = vpop.permute.xlu0 %993
    %v996 = vsel %vm210, %v994, 0
    %998 = vmatpush.bf16.msra.mxu0 0
    %999 = vmatpush.bf16.msra.mxu0 0
    %1000 = vmatpush.bf16.msra.mxu0 0
    %1001 = vmatpush.bf16.msra.mxu0 0
    %1002 = vmatpush.bf16.msra.mxu0 0
    %1003 = vmatpush.bf16.msra.mxu0 0
    %1004 = vmatpush.bf16.msra.mxu0 %v207
    %1005 = vmatpush.bf16.msra.mxu0 %v206
    %1006 = vmatmul.bf16.gmra.mxu0 %v996
    %v1007 = vpop.f32.mrf.mxu0
    %v1008 = vadd.f32 %v957, %v1007
    %v1009 = vpop.f32.mrf.mxu0
    %1010 = vdwg.mxu0
    %v1011 = vadd.f32 %v1008, %v82
    %v1012 = vmul.f32 %v1011, %v89
    %v1013 = vtanh.pop %v1012
    %v1014 = vmul.f32 %v1013, 0.5
    %v1015 = vadd.f32 %v1014, 0.5
    %v1016 = vmul.f32 %v1015, %v914
    %1018 = vrot.lane.b32.xlu0 %v1013, 64
    %v1019 = vpop.permute.xlu0 %1018
    %v1021 = vmul.f32 %v1015, %v1019
    %1023 = vrot.lane.b32.xlu0 %v1021, 32
    %v1024 = vpop.permute.xlu0 %1023
    %v1026 = vadd.f32 %v1016, %v1024
    %v1027 = vtanh.pop %v1026
    %1029 = vrot.lane.b32.xlu0 %v1027, 64
    %v1030 = vpop.permute.xlu0 %1029
    %v1032 = vmul.f32 %v1015, %v1030
    %v1033 = vpack.c.bf16 %v1032, %v1032
    %v1034 = vld [vmem:[#allocation5] sm:$0xf]
    %v1035 = vld [vmem:[#allocation5 + $0x4] sm:$0xf]
    %v1036 = vld [vmem:[#allocation5 + $0x8] sm:$0xf]
    %v1037 = vld [vmem:[#allocation5 + $0xc] sm:$0xf]
    %v1038 = vld [vmem:[%s7] sm:$0x1]
    %v1040 = vperm.slane %v1038, 0
    %1043 = vrot.lane.b32.xlu0 %v1033, 32
    %v1044 = vpop.permute.xlu0 %1043
    %v1049 = vunpack.c.l.b16 %v1034
    %v1050 = vunpack.c.l.b16 %v1035
    %v1051 = vunpack.c.l.b16 %v1036
    %v1052 = vunpack.c.l.b16 %v1037
    %v1053 = vpack.c.b16 %v1050, %v1049
    %v1054 = vpack.c.b16 %v1052, %v1051
    %v1058 = vsel %vm210, %v1044, 0
    %1060 = vmatpush.bf16.msra.mxu0 0
    %1061 = vmatpush.bf16.msra.mxu0 0
    %1062 = vmatpush.bf16.msra.mxu0 0
    %1063 = vmatpush.bf16.msra.mxu0 0
    %1064 = vmatpush.bf16.msra.mxu0 0
    %1065 = vmatpush.bf16.msra.mxu0 0
    %1066 = vmatpush.bf16.msra.mxu0 %v1054
    %1067 = vmatpush.bf16.msra.mxu0 %v1053
    %1068 = vmatmul.bf16.gmra.mxu0 %v1058
    %v1069 = vpop.f32.mrf.mxu0
    %v1070 = vadd.f32 %v1040, %v1069
    %v1071 = vpop.f32.mrf.mxu0
    %1072 = vdwg.mxu0
    %1073 = vst [vmem:[#allocation7] sm:$0xff] %v1070
    // Predicated region
    $region42: #{tpu_custom_call.1} parent=1 // pred_check
      _
    $region43: #{tpu_custom_call.1} parent=1 // pred_check_branch
      %1075 = sbr.rel (0) target = $region45
    $region44: #{tpu_custom_call.1} parent=1 // pred_region
      %1077 = vsyncadd [#allocation4], 0
      %s1079 = sshll.u32 [#allocation7], 4
      %s1080 = int_to_ptr.vmem [resolvable:$true] %s1079
      %s1081 = sshll.u32 %s8, 4
      %s1082 = int_to_ptr.hbm [resolvable:$true] %s1081
      %1084 = dma.vmem_to_hbm [thread:$0]  %s1080, 128, %s1082, [#allocation4]
    $region45: #{tpu_custom_call.1} parent=1 // pred_fallthru
      _
    // Predicated region
    $region46: #{tpu_custom_call.1} parent=1 // pred_check
      _
    $region47: #{tpu_custom_call.1} parent=1 // pred_check_branch
      %1086 = sbr.rel (0) target = $region49
    $region48: #{tpu_custom_call.1} parent=1 // pred_region
      %1088 = dma.done [#allocation4], 128
    $region49: #{tpu_custom_call.1} parent=1 // pred_fallthru
      _
    %1089 = vsyncpa [#allocation3], 1
    %1090 = vsyncpa [#allocation6], 1
    %1091 = vsyncpa [#allocation4], 1

</llo_original>
